<compile_context>
chip_gen: v6e
topology: v6e:2x2x1
jax: 0.10.0
libtpu: 0.0.40
codegen_flags: <defaults>
</compile_context>

<pallas_src>
import functools
import math

import jax
import jax.numpy as jnp
import numpy as np
from jax import lax
from jax.experimental import pallas as pl
from jax.experimental.pallas import tpu as pltpu

_MASK_VALUE = -0.7 * float(np.finfo(np.float32).max)
# Fits within v7x's 64 MiB physical VMEM; well under v5e/v6e's 128 MiB.
_VMEM_LIMIT = 48 * 1024 * 1024


def _fit(tile, dim):
    t = min(tile, dim)
    assert dim % t == 0, f"dim {dim} not divisible by tile {t}"
    return t


# -----------------------------------------------------------------------------
# Kernel 1: fused RMSNorm + linear.  The normalized (tm, K) row block is cached
# in a bf16 VMEM scratch under @pl.when(j == 0) and re-used for every output
# column tile j (j is the inner "arbitrary" axis so the scratch stays valid).
# Weight streamed in (K, tn) blocks; output emitted in `out_dtype`.
# -----------------------------------------------------------------------------
def _rms_norm_to_scratch(x_ref, ln_ref, xn_ref, eps):
    x = x_ref[...]                                       # (tm, K) f32
    var = jnp.mean(x * x, axis=-1, keepdims=True)
    xn_ref[...] = ((x * lax.rsqrt(var + eps)) * ln_ref[...]).astype(xn_ref.dtype)


def _rms_linear_bias_kernel(x_ref, ln_ref, w_ref, b_ref, o_ref, xn_ref, *, eps):
    @pl.when(pl.program_id(1) == 0)
    def _():
        _rms_norm_to_scratch(x_ref, ln_ref, xn_ref, eps)
    y = jnp.dot(xn_ref[...], w_ref[...], preferred_element_type=jnp.float32)
    o_ref[...] = (y + b_ref[...]).astype(o_ref.dtype)


def _rms_linear_nobias_kernel(x_ref, ln_ref, w_ref, o_ref, xn_ref, *, eps):
    @pl.when(pl.program_id(1) == 0)
    def _():
        _rms_norm_to_scratch(x_ref, ln_ref, xn_ref, eps)
    y = jnp.dot(xn_ref[...], w_ref[...], preferred_element_type=jnp.float32)
    o_ref[...] = y.astype(o_ref.dtype)


def rms_linear(x2d, ln_w, w, b, *, eps, tm, tn, out_dtype):
    M, K = x2d.shape
    N = w.shape[1]
    in_specs = [
        pl.BlockSpec((tm, K), lambda i, j: (i, 0)),
        pl.BlockSpec((1, K), lambda i, j: (0, 0)),
        pl.BlockSpec((K, tn), lambda i, j: (0, j)),
    ]
    args = [x2d, ln_w, w]
    if b is not None:
        in_specs.append(pl.BlockSpec((1, tn), lambda i, j: (0, j)))
        args.append(b)
        kernel = functools.partial(_rms_linear_bias_kernel, eps=eps)
    else:
        kernel = functools.partial(_rms_linear_nobias_kernel, eps=eps)
    return pl.pallas_call(
        kernel,
        out_shape=jax.ShapeDtypeStruct((M, N), out_dtype),
        grid=(M // tm, N // tn),
        in_specs=in_specs,
        out_specs=pl.BlockSpec((tm, tn), lambda i, j: (i, j)),
        scratch_shapes=[pltpu.VMEM((tm, K), jnp.bfloat16)],
        compiler_params=pltpu.CompilerParams(
            dimension_semantics=("parallel", "arbitrary"),
            vmem_limit_bytes=_VMEM_LIMIT),
    )(*args)


# -----------------------------------------------------------------------------
# Kernel 2: pre-rotate K (RoPE) once, per (batch, head, seq-tile).
# Removes the redundant per-q-tile K rotation from the attention inner loop.
# -----------------------------------------------------------------------------
def _rope_k_kernel(k_ref, cos_ref, sin_ref, o_ref, *, half):
    k = k_ref[0].astype(jnp.float32)                     # (ts, hd)
    o_ref[0] = (k * cos_ref[...]
                + pltpu.roll(k, half, 1) * sin_ref[...]).astype(o_ref.dtype)


def rope_k(qkv, cos_k, sin_k, *, num_heads, head_dim, ts):
    B, S, _ = qkv.shape
    H = num_heads * head_dim
    kernel = functools.partial(_rope_k_kernel, half=head_dim // 2)
    return pl.pallas_call(
        kernel,
        out_shape=jax.ShapeDtypeStruct((B, S, H), jnp.bfloat16),
        grid=(B, num_heads, S // ts),
        in_specs=[
            pl.BlockSpec((1, ts, head_dim),
                         lambda b, h, si: (b, si, num_heads + h)),
            pl.BlockSpec((ts, head_dim), lambda b, h, si: (si, 0)),
            pl.BlockSpec((ts, head_dim), lambda b, h, si: (si, 0)),
        ],
        out_specs=pl.BlockSpec((1, ts, head_dim), lambda b, h, si: (b, si, h)),
        compiler_params=pltpu.CompilerParams(
            dimension_semantics=("parallel", "parallel", "parallel"),
            vmem_limit_bytes=_VMEM_LIMIT),
    )(qkv, cos_k, sin_k)


# -----------------------------------------------------------------------------
# Kernel 3: flash attention with in-register causal mask.
# grid = (B, num_heads, q_tiles, kv_tiles); kv axis is the reduction axis.
# Q is rotated (RoPE, 1/sqrt(hd) folded into tables) once per q tile into a bf16
# scratch; K arrives pre-rotated; fully masked kv blocks skip compute and DMA.
# -----------------------------------------------------------------------------
def _flash_attn_kernel(q_ref, k_ref, v_ref, cosq_ref, sinq_ref,
                       o_ref, q_scr, m_scr, l_scr, acc_scr, *, tq, tk, head_dim):
    qi = pl.program_id(2)
    ki = pl.program_id(3)

    @pl.when(ki == 0)
    def _():
        m_scr[...] = jnp.full(m_scr.shape, -jnp.inf, jnp.float32)
        l_scr[...] = jnp.zeros(l_scr.shape, jnp.float32)
        acc_scr[...] = jnp.zeros(acc_scr.shape, jnp.float32)
        # RoPE on q (scale + rotate_half sign folded into the cos/sin tables),
        # hoisted out of the kv reduction loop.
        q = q_ref[0].astype(jnp.float32)
        q_scr[...] = (q * cosq_ref[...]
                      + pltpu.roll(q, head_dim // 2, 1) * sinq_ref[...]
                      ).astype(q_scr.dtype)

    # Skip key/value blocks that lie entirely above the causal diagonal.
    @pl.when(ki * tk < (qi + 1) * tq)
    def _():
        k = k_ref[0]                                     # (tk, hd) bf16, pre-rotated
        v = v_ref[0]                                     # (tk, hd) bf16
        s = lax.dot_general(q_scr[...], k, (((1,), (1,)), ((), ())),
                            preferred_element_type=jnp.float32)   # (tq, tk)

        row = qi * tq + lax.broadcasted_iota(jnp.int32, (tq, tk), 0)
        col = ki * tk + lax.broadcasted_iota(jnp.int32, (tq, tk), 1)
        s = jnp.where(row >= col, s, _MASK_VALUE)

        m_prev = m_scr[...]
        m_new = jnp.maximum(m_prev, jnp.max(s, axis=-1, keepdims=True))
        alpha = jnp.exp(m_prev - m_new)
        # TODO(synk): on v6e/v7x the exp argument could be cast to bf16 to double
        # EUP throughput; kept fp32 here for generation-agnostic numerics.
        p = jnp.exp(s - m_new)
        l_scr[...] = alpha * l_scr[...] + jnp.sum(p, axis=-1, keepdims=True)
        acc_scr[...] = alpha * acc_scr[...] + jnp.dot(
            p.astype(jnp.bfloat16), v, preferred_element_type=jnp.float32)
        m_scr[...] = m_new

    @pl.when(ki == pl.num_programs(3) - 1)
    def _():
        o_ref[0] = (acc_scr[...] *
                    pl.reciprocal(l_scr[...], approx=True)).astype(o_ref.dtype)


def flash_attention(qkv, k_rot, cos_q, sin_q, *, num_heads, head_dim, tq, tk):
    B, S, _ = qkv.shape
    H = num_heads * head_dim
    kernel = functools.partial(_flash_attn_kernel, tq=tq, tk=tk, head_dim=head_dim)

    # For fully-masked kv blocks, clamp the block index to the last valid block:
    # consecutive identical indices make the pipeline skip the redundant K/V DMA.
    def _kv_idx(qi, ki):
        return jnp.minimum(ki, ((qi + 1) * tq - 1) // tk)

    q_spec = pl.BlockSpec((1, tq, head_dim), lambda b, h, qi, ki: (b, qi, h))
    k_spec = pl.BlockSpec((1, tk, head_dim),
                          lambda b, h, qi, ki: (b, _kv_idx(qi, ki), h))
    v_spec = pl.BlockSpec((1, tk, head_dim),
                          lambda b, h, qi, ki: (b, _kv_idx(qi, ki), 2 * num_heads + h))
    cq_spec = pl.BlockSpec((tq, head_dim), lambda b, h, qi, ki: (qi, 0))

    return pl.pallas_call(
        kernel,
        out_shape=jax.ShapeDtypeStruct((B, S, H), jnp.bfloat16),
        grid=(B, num_heads, S // tq, S // tk),
        in_specs=[q_spec, k_spec, v_spec, cq_spec, cq_spec],
        out_specs=pl.BlockSpec((1, tq, head_dim), lambda b, h, qi, ki: (b, qi, h)),
        scratch_shapes=[
            pltpu.VMEM((tq, head_dim), jnp.bfloat16),    # rotated q (bf16)
            pltpu.VMEM((tq, 1), jnp.float32),            # running max
            pltpu.VMEM((tq, 1), jnp.float32),            # running denom
            pltpu.VMEM((tq, head_dim), jnp.float32),     # accumulator
        ],
        compiler_params=pltpu.CompilerParams(
            dimension_semantics=("parallel", "parallel", "parallel", "arbitrary"),
            vmem_limit_bytes=_VMEM_LIMIT),
    )(qkv, k_rot, qkv, cos_q, sin_q)


# -----------------------------------------------------------------------------
# Kernel 4: o_proj + bias + residual add (row/col tiled, bf16 activations in,
# fp32 residual stream out).
# -----------------------------------------------------------------------------
def _linear_residual_kernel(x_ref, res_ref, w_ref, b_ref, o_ref):
    y = jnp.dot(x_ref[...], w_ref[...], preferred_element_type=jnp.float32)
    o_ref[...] = res_ref[...] + y + b_ref[...]


def linear_residual(x2d, res2d, w, b, *, tm, tn):
    M, K = x2d.shape
    N = w.shape[1]
    return pl.pallas_call(
        _linear_residual_kernel,
        out_shape=jax.ShapeDtypeStruct((M, N), jnp.float32),
        grid=(M // tm, N // tn),
        in_specs=[
            pl.BlockSpec((tm, K), lambda i, j: (i, 0)),
            pl.BlockSpec((tm, tn), lambda i, j: (i, j)),
            pl.BlockSpec((K, tn), lambda i, j: (0, j)),
            pl.BlockSpec((1, tn), lambda i, j: (0, j)),
        ],
        out_specs=pl.BlockSpec((tm, tn), lambda i, j: (i, j)),
        compiler_params=pltpu.CompilerParams(
            dimension_semantics=("parallel", "parallel"),
            vmem_limit_bytes=_VMEM_LIMIT),
    )(x2d, res2d, w, b)


# -----------------------------------------------------------------------------
# Kernel 5: SiLU(gate)*up fused with K-tiled down_proj + residual.
# Output-column axis is the FULL hidden width (tn = H) so the gate/up blocks are
# read and SiLU is computed exactly once per (row-tile, k-tile).
# grid = (row_tiles, k_tiles); k is the reduction axis (fp32 accumulator).
# -----------------------------------------------------------------------------
def _swiglu_down_kernel(g_ref, u_ref, w_ref, res_ref, o_ref, acc_ref):
    kk = pl.program_id(1)

    @pl.when(kk == 0)
    def _():
        acc_ref[...] = jnp.zeros(acc_ref.shape, jnp.float32)

    g = g_ref[...].astype(jnp.float32)
    u = u_ref[...].astype(jnp.float32)
    a = (g * jax.nn.sigmoid(g)) * u                      # SiLU(gate) * up, fp32
    acc_ref[...] += jnp.dot(a.astype(w_ref.dtype), w_ref[...],
                            preferred_element_type=jnp.float32)

    @pl.when(kk == pl.num_programs(1) - 1)
    def _():
        o_ref[...] = res_ref[...] + acc_ref[...]


def swiglu_down_residual(gu2d, wd, res2d, *, inter, tm, tk):
    M = gu2d.shape[0]
    N = wd.shape[1]
    nk = inter // tk
    return pl.pallas_call(
        _swiglu_down_kernel,
        out_shape=jax.ShapeDtypeStruct((M, N), jnp.float32),
        grid=(M // tm, nk),
        in_specs=[
            pl.BlockSpec((tm, tk), lambda i, k: (i, k)),         # gate slab
            pl.BlockSpec((tm, tk), lambda i, k: (i, nk + k)),    # up slab
            pl.BlockSpec((tk, N), lambda i, k: (k, 0)),          # Wd tile
            pl.BlockSpec((tm, N), lambda i, k: (i, 0)),          # residual
        ],
        out_specs=pl.BlockSpec((tm, N), lambda i, k: (i, 0)),
        scratch_shapes=[pltpu.VMEM((tm, N), jnp.float32)],
        compiler_params=pltpu.CompilerParams(
            dimension_semantics=("parallel", "arbitrary"),
            vmem_limit_bytes=_VMEM_LIMIT),
    )(gu2d, gu2d, wd, res2d)


# -----------------------------------------------------------------------------
# Full decoder layer wrapper.
# -----------------------------------------------------------------------------
def internlm_decoder_layer(x, cos, sin, p, *, num_heads, head_dim, eps,
                           tm=256, tn=256, tk_mlp=512, tq=256, tkv=256):
    B, S, H = x.shape
    assert H == num_heads * head_dim
    assert head_dim % 128 == 0, "head_dim must be a multiple of 128 (lane-aligned)"
    I = p["wg"].shape[1]
    M = B * S

    tm_e = _fit(tm, M)
    tn_qkv = _fit(tn, 3 * H)
    tn_h = _fit(tn, H)
    tn_gu = _fit(tn, 2 * I)
    tk_e = _fit(tk_mlp, I)
    tq_e = _fit(tq, S)
    tkv_e = _fit(tkv, S)

    x2d = x.reshape(M, H)
    scale = 1.0 / math.sqrt(head_dim)

    # rotate_half sign folded into sin; 1/sqrt(head_dim) folded into q tables.
    sign = jnp.concatenate(
        [-jnp.ones((1, head_dim // 2), jnp.float32),
         jnp.ones((1, head_dim // 2), jnp.float32)], axis=1)
    sin_rot = sin * sign
    cos_q = cos * scale
    sin_q = sin_rot * scale
    cos_k = cos
    sin_k = sin_rot

    # bf16 weights (fp32 accumulation inside the kernels).
    wqkv = jnp.concatenate([p["wq"], p["wk"], p["wv"]], axis=1).astype(jnp.bfloat16)
    bqkv = jnp.concatenate([p["bq"], p["bk"], p["bv"]], axis=1)
    wo = p["wo"].astype(jnp.bfloat16)
    wgu = jnp.concatenate([p["wg"], p["wu"]], axis=1).astype(jnp.bfloat16)
    wd = p["wd"].astype(jnp.bfloat16)

    # 1) input RMSNorm + fused QKV projection (bf16 intermediate).
    qkv2d = rms_linear(x2d, p["ln1"], wqkv, bqkv, eps=eps,
                       tm=tm_e, tn=tn_qkv, out_dtype=jnp.bfloat16)
    qkv = qkv2d.reshape(B, S, 3 * H)

    # 2) pre-rotate K once (RoPE hoisted out of the attention kv loop).
    k_rot = rope_k(qkv, cos_k, sin_k,
                   num_heads=num_heads, head_dim=head_dim, ts=tkv_e)

    # 3) causal flash attention (per-head grid, q rotated in-kernel once/q-tile).
    ctx = flash_attention(qkv, k_rot, cos_q, sin_q,
                          num_heads=num_heads, head_dim=head_dim,
                          tq=tq_e, tk=tkv_e)

    # 4) o_proj + residual (fp32 residual stream).
    h1_2d = linear_residual(ctx.reshape(M, H), x2d, wo, p["bo"], tm=tm_e, tn=tn_h)

    # 5) post-attention RMSNorm + fused gate/up projection (no bias, bf16 out).
    gu2d = rms_linear(h1_2d, p["ln2"], wgu, None, eps=eps,
                      tm=tm_e, tn=tn_gu, out_dtype=jnp.bfloat16)

    # 6) SwiGLU + K-tiled down_proj (full-width output tile) + residual.
    out2d = swiglu_down_residual(gu2d, wd, h1_2d, inter=I, tm=tm_e, tk=tk_e)
    return out2d.reshape(B, S, H)


# -----------------------------------------------------------------------------
# Pure-JAX reference (mirrors the PyTorch forward) for verification.
# -----------------------------------------------------------------------------
def reference_layer(x, mask, cos, sin, p, *, num_heads, head_dim, eps):
    B, S, H = x.shape

    def rms(h, w):
        var = jnp.mean(h * h, axis=-1, keepdims=True)
        return w * (h * lax.rsqrt(var + eps))

    def rot(t):
        t1 = t[..., : head_dim // 2]
        t2 = t[..., head_dim // 2:]
        return jnp.concatenate([-t2, t1], axis=-1)

    residual = x
    hn = rms(x, p["ln1"])
    q = hn @ p["wq"] + p["bq"]
    k = hn @ p["wk"] + p["bk"]
    v = hn @ p["wv"] + p["bv"]

    def split(t):
        return t.reshape(B, S, num_heads, head_dim).transpose(0, 2, 1, 3)

    q, k, v = split(q), split(k), split(v)
    c = cos[None, None]
    s = sin[None, None]
    q = q * c + rot(q) * s
    k = k * c + rot(k) * s

    scores = jnp.einsum("bhqd,bhkd->bhqk", q, k) / math.sqrt(head_dim)
    scores = scores + mask
    scores = jnp.maximum(scores, jnp.finfo(jnp.float32).min)
    w = jax.nn.softmax(scores, axis=-1)
    o = jnp.einsum("bhqk,bhkd->bhqd", w, v)
    o = o.transpose(0, 2, 1, 3).reshape(B, S, H)
    attn = o @ p["wo"] + p["bo"]

    h1 = residual + attn
    hn2 = rms(h1, p["ln2"])
    gate = hn2 @ p["wg"]
    up = hn2 @ p["wu"]
    mlp = (gate * jax.nn.sigmoid(gate) * up) @ p["wd"]
    return h1 + mlp


# -----------------------------------------------------------------------------
# Main: deterministic small-shape test (head_dim matches the real model's 128).
# -----------------------------------------------------------------------------
if __name__ == "__main__":
    B, S = 2, 256
    NUM_HEADS = 2
    HEAD_DIM = 128
    H = NUM_HEADS * HEAD_DIM          # 256
    INTER = 512
    EPS = 1e-6

    key = jax.random.PRNGKey(0)
    ks = jax.random.split(key, 16)
    init = lambda k, shape: 0.02 * jax.random.normal(k, shape, jnp.float32)

    params = {
        "ln1": jnp.ones((1, H), jnp.float32),
        "ln2": jnp.ones((1, H), jnp.float32),
        "wq": init(ks[0], (H, H)), "bq": init(ks[1], (1, H)),
        "wk": init(ks[2], (H, H)), "bk": init(ks[3], (1, H)),
        "wv": init(ks[4], (H, H)), "bv": init(ks[5], (1, H)),
        "wo": init(ks[6], (H, H)), "bo": init(ks[7], (1, H)),
        "wg": init(ks[8], (H, INTER)),
        "wu": init(ks[9], (H, INTER)),
        "wd": init(ks[10], (INTER, H)),
    }

    x = jax.random.normal(ks[11], (B, S, H), jnp.float32)

    # Rotary tables for positions 0..S-1 (position_ids = arange(S)).
    inv_freq = 1.0 / (10000.0 ** (jnp.arange(0, HEAD_DIM, 2, dtype=jnp.float32)
                                  / HEAD_DIM))
    t = jnp.arange(S, dtype=jnp.float32)
    freqs = jnp.einsum("i,j->ij", t, inv_freq)
    emb = jnp.concatenate([freqs, freqs], axis=-1)
    cos = jnp.cos(emb)
    sin = jnp.sin(emb)

    out = internlm_decoder_layer(
        x, cos, sin, params,
        num_heads=NUM_HEADS, head_dim=HEAD_DIM, eps=EPS,
    )
    out = jax.block_until_ready(out)

    # Reference uses the standard causal additive mask (what the kernel builds
    # in-register with iota comparisons).
    causal = jnp.tril(jnp.ones((S, S), bool))
    mask = jnp.where(causal, 0.0, jnp.finfo(jnp.float32).min).astype(jnp.float32)
    mask = jnp.broadcast_to(mask[None, None], (B, 1, S, S))

    ref = reference_layer(
        x, mask, cos, sin, params,
        num_heads=NUM_HEADS, head_dim=HEAD_DIM, eps=EPS,
    )
    ref = jax.block_until_ready(ref)

    np.testing.assert_allclose(np.asarray(out), np.asarray(ref),
                               rtol=2e-2, atol=2e-2)
    print("KERNEL_OK")
</pallas_src>

<mosaic_0001>
module attributes {stable_mosaic.version = 11 : i64} {
  func.func @_rms_linear_bias_kernel(%arg0: i32, %arg1: i32, %arg2: memref<256x256xf32, #tpu.memory_space<vmem>>, %arg3: memref<1x256xf32, #tpu.memory_space<vmem>>, %arg4: memref<256x256xbf16, #tpu.memory_space<vmem>>, %arg5: memref<1x256xf32, #tpu.memory_space<vmem>>, %arg6: memref<256x256xbf16, #tpu.memory_space<vmem>>, %arg7: memref<256x256xbf16, #tpu.memory_space<vmem>>) attributes {dimension_semantics = [#tpu.dimension_semantics<parallel>, #tpu.dimension_semantics<arbitrary>], iteration_bounds = array<i64: 2, 3>, scalar_prefetch = 0 : i64, scratch_operands = 1 : i64, tpu.core_type = #tpu.core_type<tc>, window_params = [{transform_indices = @transform_0, window_bounds = array<i64: 256, 256>}, {pipeline_mode = #tpu.pipeline_mode<synchronous>, transform_indices = @transform_1, window_bounds = array<i64: 1, 256>}, {transform_indices = @transform_2, window_bounds = array<i64: 256, 256>}, {transform_indices = @transform_3, window_bounds = array<i64: 1, 256>}, {transform_indices = @transform_4, window_bounds = array<i64: 256, 256>}]} {
    %c0_i32 = arith.constant 0 : i32
    %0 = arith.cmpi eq, %arg1, %c0_i32 : i32
    %1 = arith.extui %0 : i1 to i32
    %c0_i32_0 = arith.constant 0 : i32
    %2 = arith.cmpi ne, %1, %c0_i32_0 : i32
    scf.if %2 {
      %c0_8 = arith.constant 0 : index
      %c0_9 = arith.constant 0 : index
      %11 = vector.load %arg2[%c0_8, %c0_9] : memref<256x256xf32, #tpu.memory_space<vmem>>, vector<256x256xf32>
      %12 = arith.mulf %11, %11 : vector<256x256xf32>
      %cst_10 = arith.constant dense<0.000000e+00> : vector<256xf32>
      %13 = vector.multi_reduction <add>, %12, %cst_10 [1] : vector<256x256xf32> to vector<256xf32>
      %14 = vector.shape_cast %13 : vector<256xf32> to vector<256x1xf32>
      %cst_11 = arith.constant 2.560000e+02 : f32
      %15 = vector.broadcast %cst_11 : f32 to vector<256x1xf32>
      %16 = arith.divf %14, %15 : vector<256x1xf32>
      %cst_12 = arith.constant 9.99999997E-7 : f32
      %17 = vector.broadcast %cst_12 : f32 to vector<256x1xf32>
      %18 = arith.addf %16, %17 : vector<256x1xf32>
      %19 = math.rsqrt %18 : vector<256x1xf32>
      %20 = vector.broadcast %19 : vector<256x1xf32> to vector<256x256xf32>
      %21 = arith.mulf %11, %20 : vector<256x256xf32>
      %c0_13 = arith.constant 0 : index
      %c0_14 = arith.constant 0 : index
      %22 = vector.load %arg3[%c0_13, %c0_14] : memref<1x256xf32, #tpu.memory_space<vmem>>, vector<1x256xf32>
      %23 = vector.broadcast %22 : vector<1x256xf32> to vector<256x256xf32>
      %24 = arith.mulf %21, %23 : vector<256x256xf32>
      %25 = arith.truncf %24 : vector<256x256xf32> to vector<256x256xbf16>
      %c0_15 = arith.constant 0 : index
      %c0_16 = arith.constant 0 : index
      %26 = vector.load %arg7[%c0_15, %c0_16] : memref<256x256xbf16, #tpu.memory_space<vmem>>, vector<256x256xbf16>
      tpu.vector_store %arg7[%c0_15, %c0_16], %25 {strides = array<i32>} : memref<256x256xbf16, #tpu.memory_space<vmem>>, vector<256x256xbf16>,
    } else {
    }
    %c0 = arith.constant 0 : index
    %c0_1 = arith.constant 0 : index
    %3 = vector.load %arg7[%c0, %c0_1] : memref<256x256xbf16, #tpu.memory_space<vmem>>, vector<256x256xbf16>
    %c0_2 = arith.constant 0 : index
    %c0_3 = arith.constant 0 : index
    %4 = vector.load %arg4[%c0_2, %c0_3] : memref<256x256xbf16, #tpu.memory_space<vmem>>, vector<256x256xbf16>
    %cst = arith.constant dense<0.000000e+00> : vector<256x256xf32>
    %5 = tpu.matmul %3, %4, %cst {dimension_numbers = #tpu.dot_dimension_numbers<[1], [0], [0], [1], [0, 0, 1, 1], [], []>} : vector<256x256xbf16>, vector<256x256xbf16>, vector<256x256xf32> -> vector<256x256xf32>
    %c0_4 = arith.constant 0 : index
    %c0_5 = arith.constant 0 : index
    %6 = vector.load %arg5[%c0_4, %c0_5] : memref<1x256xf32, #tpu.memory_space<vmem>>, vector<1x256xf32>
    %7 = vector.broadcast %6 : vector<1x256xf32> to vector<256x256xf32>
    %8 = arith.addf %5, %7 : vector<256x256xf32>
    %9 = arith.truncf %8 : vector<256x256xf32> to vector<256x256xbf16>
    %c0_6 = arith.constant 0 : index
    %c0_7 = arith.constant 0 : index
    %10 = vector.load %arg6[%c0_6, %c0_7] : memref<256x256xbf16, #tpu.memory_space<vmem>>, vector<256x256xbf16>
    tpu.vector_store %arg6[%c0_6, %c0_7], %9 {strides = array<i32>} : memref<256x256xbf16, #tpu.memory_space<vmem>>, vector<256x256xbf16>,
    return
  }
  func.func @transform_0(%arg0: i32, %arg1: i32) -> (i32, i32) {
    %c0_i32 = arith.constant 0 : i32
    %c0_i32_0 = arith.constant 0 : i32
    return %arg0, %c0_i32 : i32, i32
  }
  func.func @transform_1(%arg0: i32, %arg1: i32) -> (i32, i32) {
    %c0_i32 = arith.constant 0 : i32
    %c0_i32_0 = arith.constant 0 : i32
    %c0_i32_1 = arith.constant 0 : i32
    return %c0_i32, %c0_i32_0 : i32, i32
  }
  func.func @transform_2(%arg0: i32, %arg1: i32) -> (i32, i32) {
    %c0_i32 = arith.constant 0 : i32
    %c0_i32_0 = arith.constant 0 : i32
    return %c0_i32, %arg1 : i32, i32
  }
  func.func @transform_3(%arg0: i32, %arg1: i32) -> (i32, i32) {
    %c0_i32 = arith.constant 0 : i32
    %c0_i32_0 = arith.constant 0 : i32
    return %c0_i32, %arg1 : i32, i32
  }
  func.func @transform_4(%arg0: i32, %arg1: i32) -> (i32, i32) {
    %c0_i32 = arith.constant 0 : i32
    return %arg0, %arg1 : i32, i32
  }
}

</mosaic_0001>

<llo_original>
// kernel: tpu_custom_call.1
$region0: #{tpu_custom_call.1}
  #allocation0 [shape = 'u32[]', space=smem, size = 0x4, offset = 0x4, fixed_abs, tag = 'smem constant byte address 0x4 - core index']
  #allocation1 [shape = 'u32[144,128]{1,0:T(1,128)}', space=vmem, size = 0x12000, scoped, tag = 'internal scratch']
  #allocation2 [shape = 'bf16[256,256]{1,0:T(8,128)(2,1)}', space=vmem, size = 0x20000, scoped, tag = 'scratch operand']
  %s0 = inlined_call_operand.hbm [shape: f32[512,256], index: 0, kind: input, shape index: {}]
  %s1 = inlined_call_operand.hbm [shape: f32[1,256], index: 1, kind: input, shape index: {}]
  %s2 = inlined_call_operand.hbm [shape: bf16[256,768], index: 2, kind: input, shape index: {}]
  %s3 = inlined_call_operand.hbm [shape: f32[1,768], index: 3, kind: input, shape index: {}]
  %s4 = inlined_call_operand.hbm [shape: bf16[512,768], index: 4, kind: output, shape index: {}]
  %s5 = sld [smem:[#allocation0]]
  $region69: #{tpu_custom_call.1} parent=0
    _
  %s7 = ssub.s32 1, %s5
  %s8 = scalar_select 0, %s7, %s5
  $region1: #{tpu_custom_call.1} parent=0
    #allocation3 [shape = 'u8[524288]{0}', space=vmem, size = 0x80000, scoped, tag = 'input window, operand 0']
    #allocation4 [shape = 's32[2]{0}', space=sflag, size = 0x8, scoped, tag = 'scoped memory for tpu_custom_call.1']
    #allocation5 [shape = 's32[2]{0}', space=sflag, size = 0x8, scoped, tag = 'scoped memory for tpu_custom_call.1']
    #allocation6 [shape = 'u8[1024]{0}', space=vmem, size = 0x400, scoped, tag = 'input window, operand 1, single buffered']
    #allocation7 [shape = 's32[1]{0}', space=sflag, size = 0x4, scoped, tag = 'scoped memory for tpu_custom_call.1']
    #allocation8 [shape = 'u8[262144]{0}', space=vmem, size = 0x40000, scoped, tag = 'input window, operand 2']
    #allocation9 [shape = 'u8[2048]{0}', space=vmem, size = 0x800, scoped, tag = 'input window, operand 3']
    #allocation10 [shape = 'u8[262144]{0}', space=vmem, size = 0x40000, scoped, tag = 'output window, operand 0']
    %9 = vsyncpa [#allocation4], 0
    %s10 = scalar_lea.sflag [#allocation4], 1
    %11 = vsyncpa %s10, 0
    %12 = vsyncpa [#allocation7], 0
    %13 = vsyncpa [#allocation5], 0
    %s14 = scalar_lea.sflag [#allocation5], 1
    %15 = vsyncpa %s14, 0
    loop: start=0, step=1, limit=8
    $region2: #{tpu_custom_call.1} parent=1 // loop_pre_header
      _
    $region3: #{tpu_custom_call.1} parent=1 // loop_header
      %s17 = sphi 0, %s21
      %p18 = scmp.ge.s32.totalorder %s17, 8
      %s24 = sphi 0, %s36
      %s25 = sphi 0, %s32
      %s26 = sphi 0, %s24
      %s27 = sphi 0, %s25
      %s28 = sphi 0, %s26
      %s29 = sphi 0, %s27
      %s39 = sphi 0, %s41
      %s42 = sphi 0, %s39
      %s43 = sphi 0, %s42
      %s59 = sphi 0, %s43
      %s63 = sphi 0, %s63
      %s65 = sphi 0, %s63
      %s66 = sphi 0, %s65
      %s80 = sphi 0, %s66
      %s86 = sphi 0, %s88
      %s89 = sphi 0, %s86
      %s90 = sphi 0, %s89
      %s106 = sphi 0, %s90
      %s112 = sphi 0, %s114
      %s115 = sphi 0, %s112
      %s116 = sphi 0, %s115
      %s132 = sphi 0, %s116
      %s140 = sphi 0, %s142
      %s143 = sphi 0, %s140
      %s144 = sphi 0, %s143
      %s160 = sphi 0, %s144
    $region4: #{tpu_custom_call.1} parent=1 // loop_header_branch
      %20 = sbr.rel (%p18) target = $region8
    $region5: #{tpu_custom_call.1} parent=1 // loop_body
      %s22 = ssub.s32 %s17, 1
      %s23 = ssub.s32 %s17, 2
      %s30 = sadd.s32 1, %s25
      %p31 = scmp.ge.s32.totalorder %s30, 3
      %s32 = scalar_select %p31, 0, %s30
      %s33 = sadd.s32 1, %s24
      %s34 = scalar_select %p31, %s33, %s24
      %p35 = scmp.ge.s32.totalorder %s34, 2
      %s36 = scalar_select %p35, 0, %s34
      %s37 = ssub.s32 %s24, %s36
      %p38 = scmp.eq.s32.totalorder %s37, 0
      %s40 = sadd.s32 %s39, 1
      %s41 = scalar_select %p38, %s39, %s40
      %p44 = pneg %p38
      %p45 = scmp.eq.s32.totalorder %s17, 5
      %p46 = por %p44, %p45
      %p47 = scmp.ne.s32.totalorder %s39, %s42
      %p48 = scmp.eq.s32.totalorder %s17, 0
      %p49 = por %p47, %p48
      %p50 = scmp.ne.s32.totalorder %s39, %s42
      %p51 = scmp.eq.s32.totalorder %s22, 5
      %p52 = por %p50, %p51
      %p53 = scmp.ne.s32.totalorder %s42, %s43
      %p54 = scmp.eq.s32.totalorder %s22, 0
      %p55 = por %p53, %p54
      %p56 = scmp.ne.s32.totalorder %s42, %s43
      %p57 = scmp.eq.s32.totalorder %s23, 5
      %p58 = por %p56, %p57
      %p60 = scmp.ne.s32.totalorder %s43, %s59
      %p61 = scmp.eq.s32.totalorder %s23, 0
      %p62 = por %p60, %p61
      %s64 = sadd.s32 %s63, 1
      %p67 = scmp.eq.s32.totalorder %s17, 5
      %p68 = scmp.ne.s32.totalorder %s63, %s65
      %p69 = scmp.eq.s32.totalorder %s17, 0
      %p70 = por %p68, %p69
      %p71 = scmp.ne.s32.totalorder %s63, %s65
      %p72 = scmp.eq.s32.totalorder %s22, 5
      %p73 = por %p71, %p72
      %p74 = scmp.ne.s32.totalorder %s65, %s66
      %p75 = scmp.eq.s32.totalorder %s22, 0
      %p76 = por %p74, %p75
      %p77 = scmp.ne.s32.totalorder %s65, %s66
      %p78 = scmp.eq.s32.totalorder %s23, 5
      %p79 = por %p77, %p78
      %p81 = scmp.ne.s32.totalorder %s66, %s80
      %p82 = scmp.eq.s32.totalorder %s23, 0
      %p83 = por %p81, %p82
      %s84 = ssub.s32 %s25, %s32
      %p85 = scmp.eq.s32.totalorder %s84, 0
      %s87 = sadd.s32 %s86, 1
      %s88 = scalar_select %p85, %s86, %s87
      %p91 = pneg %p85
      %p92 = scmp.eq.s32.totalorder %s17, 5
      %p93 = por %p91, %p92
      %p94 = scmp.ne.s32.totalorder %s86, %s89
      %p95 = scmp.eq.s32.totalorder %s17, 0
      %p96 = por %p94, %p95
      %p97 = scmp.ne.s32.totalorder %s86, %s89
      %p98 = scmp.eq.s32.totalorder %s22, 5
      %p99 = por %p97, %p98
      %p100 = scmp.ne.s32.totalorder %s89, %s90
      %p101 = scmp.eq.s32.totalorder %s22, 0
      %p102 = por %p100, %p101
      %p103 = scmp.ne.s32.totalorder %s89, %s90
      %p104 = scmp.eq.s32.totalorder %s23, 5
      %p105 = por %p103, %p104
      %p107 = scmp.ne.s32.totalorder %s90, %s106
      %p108 = scmp.eq.s32.totalorder %s23, 0
      %p109 = por %p107, %p108
      %s110 = ssub.s32 %s25, %s32
      %p111 = scmp.eq.s32.totalorder %s110, 0
      %s113 = sadd.s32 %s112, 1
      %s114 = scalar_select %p111, %s112, %s113
      %p117 = pneg %p111
      %p118 = scmp.eq.s32.totalorder %s17, 5
      %p119 = por %p117, %p118
      %p120 = scmp.ne.s32.totalorder %s112, %s115
      %p121 = scmp.eq.s32.totalorder %s17, 0
      %p122 = por %p120, %p121
      %p123 = scmp.ne.s32.totalorder %s112, %s115
      %p124 = scmp.eq.s32.totalorder %s22, 5
      %p125 = por %p123, %p124
      %p126 = scmp.ne.s32.totalorder %s115, %s116
      %p127 = scmp.eq.s32.totalorder %s22, 0
      %p128 = por %p126, %p127
      %p129 = scmp.ne.s32.totalorder %s115, %s116
      %p130 = scmp.eq.s32.totalorder %s23, 5
      %p131 = por %p129, %p130
      %p133 = scmp.ne.s32.totalorder %s116, %s132
      %p134 = scmp.eq.s32.totalorder %s23, 0
      %p135 = por %p133, %p134
      %s136 = ssub.s32 %s24, %s36
      %s137 = ssub.s32 %s25, %s32
      %s138 = sor.u32 %s136, %s137
      %p139 = scmp.eq.s32.totalorder %s138, 0
      %s141 = sadd.s32 %s140, 1
      %s142 = scalar_select %p139, %s140, %s141
      %p145 = pneg %p139
      %p146 = scmp.eq.s32.totalorder %s17, 5
      %p147 = por %p145, %p146
      %p148 = scmp.ne.s32.totalorder %s140, %s143
      %p149 = scmp.eq.s32.totalorder %s17, 0
      %p150 = por %p148, %p149
      %p151 = scmp.ne.s32.totalorder %s140, %s143
      %p152 = scmp.eq.s32.totalorder %s22, 5
      %p153 = por %p151, %p152
      %p154 = scmp.ne.s32.totalorder %s143, %s144
      %p155 = scmp.eq.s32.totalorder %s22, 0
      %p156 = por %p154, %p155
      %p157 = scmp.ne.s32.totalorder %s143, %s144
      %p158 = scmp.eq.s32.totalorder %s23, 5
      %p159 = por %p157, %p158
      %p161 = scmp.ne.s32.totalorder %s144, %s160
      %p162 = scmp.eq.s32.totalorder %s23, 0
      %p163 = por %p161, %p162
      %p164 = scmp.le.s32.totalorder 1, %s17
      %p165 = scmp.lt.s32.totalorder %s17, 7
      %p166 = pnand %p164, %p165
      %p167 = pneg %p166
      // Predicated region
      $region9: #{tpu_custom_call.1} parent=5 // pred_check
        _
      $region10: #{tpu_custom_call.1} parent=5 // pred_check_branch
        %169 = sbr.rel (%p166) target = $region12
      $region11: #{tpu_custom_call.1} parent=5 // pred_region
        %s170 = ssub.s32 %s17, 1
        // Predicated region
        $region13: #{tpu_custom_call.1} parent=11 // pred_check
          %p171 = pneg %p76
        $region14: #{tpu_custom_call.1} parent=11 // pred_check_branch
          %173 = sbr.rel (%p171) target = $region16
        $region15: #{tpu_custom_call.1} parent=11 // pred_region
          %s175 = ssub.s32 32, 32
          %176 = vsyncadd [#allocation7], %s175
          %s178 = sshll.u32 [#allocation6], 4
          %s179 = int_to_ptr.vmem [resolvable:$true] %s178
          %181 = dma.hbm_to_vmem [thread:$0]  %s1, 32, %s179, [#allocation7]
        $region16: #{tpu_custom_call.1} parent=11 // pred_fallthru
          _
      $region12: #{tpu_custom_call.1} parent=5 // pred_fallthru
        _
      %p182 = scmp.lt.s32.totalorder %s17, 6
      // Predicated region
      $region17: #{tpu_custom_call.1} parent=5 // pred_check
        %p183 = pneg %p182
      $region18: #{tpu_custom_call.1} parent=5 // pred_check_branch
        %185 = sbr.rel (%p183) target = $region20
      $region19: #{tpu_custom_call.1} parent=5 // pred_region
        // Predicated region
        $region21: #{tpu_custom_call.1} parent=19 // pred_check
          %p186 = pneg %p49
        $region22: #{tpu_custom_call.1} parent=19 // pred_check_branch
          %188 = sbr.rel (%p186) target = $region24
        $region23: #{tpu_custom_call.1} parent=19 // pred_region
          %s189 = sand.u32 %s17, 1
          %s190 = scalar_lea.sflag [#allocation4], %s189
          %s191 = sand.u32 %s39, 1
          %s192 = smul.addr %s191, 512
          %s193 = scalar_lea.vmem [#allocation3], %s192
          %s194 = smul.u32 32, %s24
          %s196 = ssub.s32 8192, 8192
          %197 = vsyncadd %s190, %s196
          %s198 = smul.addr %s194, 2
          %s199 = smul.addr %s198, 128
          %s200 = scalar_lea.hbm %s0, %s199
          %s201 = sshll.u32 %s193, 4
          %s202 = int_to_ptr.vmem [resolvable:$true] %s201
          %207 = dma.hbm_to_vmem [thread:$0]  %s200, 8192, %s202, %s190, 256, 256, 16
        $region24: #{tpu_custom_call.1} parent=19 // pred_fallthru
          _
        // Predicated region
        $region25: #{tpu_custom_call.1} parent=19 // pred_check
          %p208 = pneg %p96
        $region26: #{tpu_custom_call.1} parent=19 // pred_check_branch
          %210 = sbr.rel (%p208) target = $region28
        $region27: #{tpu_custom_call.1} parent=19 // pred_region
          %s211 = sand.u32 %s17, 1
          %s212 = scalar_lea.sflag [#allocation4], %s211
          %s213 = sand.u32 %s86, 1
          %s214 = smul.addr %s213, 256
          %s215 = scalar_lea.vmem [#allocation8], %s214
          %s216 = smul.u32 2, %s25
          %s218 = ssub.s32 4096, 4096
          %219 = vsyncadd %s212, %s218
          %s220 = smul.addr %s216, 64
          %s221 = scalar_lea.hbm %s2, %s220
          %s222 = sshll.u32 %s215, 4
          %s223 = int_to_ptr.vmem [resolvable:$true] %s222
          %228 = dma.hbm_to_vmem [thread:$0]  %s221, 4096, %s223, %s212, 384, 128, 8
        $region28: #{tpu_custom_call.1} parent=19 // pred_fallthru
          _
        // Predicated region
        $region29: #{tpu_custom_call.1} parent=19 // pred_check
          %p229 = pneg %p122
        $region30: #{tpu_custom_call.1} parent=19 // pred_check_branch
          %231 = sbr.rel (%p229) target = $region32
        $region31: #{tpu_custom_call.1} parent=19 // pred_region
          %s232 = sand.u32 %s17, 1
          %s233 = scalar_lea.sflag [#allocation4], %s232
          %s234 = sand.u32 %s112, 1
          %s235 = smul.addr %s234, 2
          %s236 = scalar_lea.vmem [#allocation9], %s235
          %s237 = smul.u32 2, %s25
          %s239 = ssub.s32 32, 32
          %240 = vsyncadd %s233, %s239
          %s241 = smul.addr %s237, 16
          %s242 = scalar_lea.hbm %s3, %s241
          %s244 = sshll.u32 %s236, 4
          %s245 = int_to_ptr.vmem [resolvable:$true] %s244
          %247 = dma.hbm_to_vmem [thread:$0]  %s242, 32, %s245, %s233
        $region32: #{tpu_custom_call.1} parent=19 // pred_fallthru
          _
      $region20: #{tpu_custom_call.1} parent=5 // pred_fallthru
        _
      %p248 = scmp.le.s32.totalorder 1, %s17
      %p249 = scmp.lt.s32.totalorder %s17, 7
      %p250 = pnand %p248, %p249
      %p251 = pneg %p250
      // Predicated region
      $region33: #{tpu_custom_call.1} parent=5 // pred_check
        _
      $region34: #{tpu_custom_call.1} parent=5 // pred_check_branch
        %253 = sbr.rel (%p250) target = $region36
      $region35: #{tpu_custom_call.1} parent=5 // pred_region
        %s254 = ssub.s32 %s17, 1
        %s255 = sand.u32 %s22, 1
        %s256 = scalar_lea.sflag [#allocation4], %s255
        %s257 = sand.u32 %s42, 1
        %s258 = smul.addr %s257, 512
        %s259 = scalar_lea.vmem [#allocation3], %s258
        // Predicated region
        $region37: #{tpu_custom_call.1} parent=35 // pred_check
          %p260 = pneg %p55
        $region38: #{tpu_custom_call.1} parent=35 // pred_check_branch
          %262 = sbr.rel (%p260) target = $region40
        $region39: #{tpu_custom_call.1} parent=35 // pred_region
          %263 = dma.done %s256, 8192
        $region40: #{tpu_custom_call.1} parent=35 // pred_fallthru
          _
        // Predicated region
        $region41: #{tpu_custom_call.1} parent=35 // pred_check
          %p264 = pneg %p76
        $region42: #{tpu_custom_call.1} parent=35 // pred_check_branch
          %266 = sbr.rel (%p264) target = $region44
        $region43: #{tpu_custom_call.1} parent=35 // pred_region
          %267 = dma.done [#allocation7], 32
        $region44: #{tpu_custom_call.1} parent=35 // pred_fallthru
          _
        %s268 = sand.u32 %s22, 1
        %s269 = scalar_lea.sflag [#allocation4], %s268
        %s270 = sand.u32 %s89, 1
        %s271 = smul.addr %s270, 256
        %s272 = scalar_lea.vmem [#allocation8], %s271
        // Predicated region
        $region45: #{tpu_custom_call.1} parent=35 // pred_check
          %p273 = pneg %p102
        $region46: #{tpu_custom_call.1} parent=35 // pred_check_branch
          %275 = sbr.rel (%p273) target = $region48
        $region47: #{tpu_custom_call.1} parent=35 // pred_region
          %276 = dma.done %s269, 4096
        $region48: #{tpu_custom_call.1} parent=35 // pred_fallthru
          _
        %s277 = sand.u32 %s22, 1
        %s278 = scalar_lea.sflag [#allocation4], %s277
        %s279 = sand.u32 %s115, 1
        %s280 = smul.addr %s279, 2
        %s281 = scalar_lea.vmem [#allocation9], %s280
        // Predicated region
        $region49: #{tpu_custom_call.1} parent=35 // pred_check
          %p282 = pneg %p128
        $region50: #{tpu_custom_call.1} parent=35 // pred_check_branch
          %284 = sbr.rel (%p282) target = $region52
        $region51: #{tpu_custom_call.1} parent=35 // pred_region
          %285 = dma.done %s278, 32
        $region52: #{tpu_custom_call.1} parent=35 // pred_fallthru
          _
        %s286 = sand.u32 %s22, 1
        %s287 = scalar_lea.sflag [#allocation4], %s286
        %s288 = sand.u32 %s42, 1
        %s289 = smul.addr %s288, 512
        %s290 = scalar_lea.vmem [#allocation3], %s289
        %p291 = pneg %p55
        %p292 = pneg %p52
        %p293 = pneg %p76
        %p294 = pneg %p73
        %s295 = sand.u32 %s22, 1
        %s296 = scalar_lea.sflag [#allocation4], %s295
        %s297 = sand.u32 %s89, 1
        %s298 = smul.addr %s297, 256
        %s299 = scalar_lea.vmem [#allocation8], %s298
        %p300 = pneg %p102
        %p301 = pneg %p99
        %s302 = sand.u32 %s22, 1
        %s303 = scalar_lea.sflag [#allocation4], %s302
        %s304 = sand.u32 %s115, 1
        %s305 = smul.addr %s304, 2
        %s306 = scalar_lea.vmem [#allocation9], %s305
        %p307 = pneg %p128
        %p308 = pneg %p125
        %p309 = pneg %p156
        %p310 = pneg %p153
        %s311 = sand.u32 %s143, 1
        %s312 = scalar_lea.sflag [#allocation5], %s311
        %s313 = sand.u32 %s143, 1
        %s314 = smul.addr %s313, 256
        %s315 = scalar_lea.vmem [#allocation10], %s314
        %s316 = smul.u32 32, %s26
        %s317 = smul.u32 2, %s27
        %s318 = smul.u32 2, %s27
        %s319 = smul.u32 32, %s26
        %s320 = smul.u32 2, %s27
        %p321 = scmp.eq.s32.totalorder %s27, 0
        // Predicated region
        $region53: #{tpu_custom_call.1} parent=35 // pred_check
          %p322 = pneg %p321
        $region54: #{tpu_custom_call.1} parent=35 // pred_check_branch
          %324 = sbr.rel (%p322) target = $region56
        $region55: #{tpu_custom_call.1} parent=35 // pred_region
          %v325 = vld [vmem:[%s259] sm:$0xff]
          %v326 = vld [vmem:[%s259 + $0x8] sm:$0xff]
          %v327 = vld [vmem:[%s259 + $0x10] sm:$0xff]
          %v328 = vld [vmem:[%s259 + $0x18] sm:$0xff]
          %v329 = vld [vmem:[%s259 + $0x20] sm:$0xff]
          %v330 = vld [vmem:[%s259 + $0x28] sm:$0xff]
          %v331 = vld [vmem:[%s259 + $0x30] sm:$0xff]
          %v332 = vld [vmem:[%s259 + $0x38] sm:$0xff]
          %v333 = vld [vmem:[%s259 + $0x40] sm:$0xff]
          %v334 = vld [vmem:[%s259 + $0x48] sm:$0xff]
          %v335 = vld [vmem:[%s259 + $0x50] sm:$0xff]
          %v336 = vld [vmem:[%s259 + $0x58] sm:$0xff]
          %v337 = vld [vmem:[%s259 + $0x60] sm:$0xff]
          %v338 = vld [vmem:[%s259 + $0x68] sm:$0xff]
          %v339 = vld [vmem:[%s259 + $0x70] sm:$0xff]
          %v340 = vld [vmem:[%s259 + $0x78] sm:$0xff]
          %v341 = vld [vmem:[%s259 + $0x80] sm:$0xff]
          %v342 = vld [vmem:[%s259 + $0x88] sm:$0xff]
          %v343 = vld [vmem:[%s259 + $0x90] sm:$0xff]
          %v344 = vld [vmem:[%s259 + $0x98] sm:$0xff]
          %v345 = vld [vmem:[%s259 + $0xa0] sm:$0xff]
          %v346 = vld [vmem:[%s259 + $0xa8] sm:$0xff]
          %v347 = vld [vmem:[%s259 + $0xb0] sm:$0xff]
          %v348 = vld [vmem:[%s259 + $0xb8] sm:$0xff]
          %v349 = vld [vmem:[%s259 + $0xc0] sm:$0xff]
          %v350 = vld [vmem:[%s259 + $0xc8] sm:$0xff]
          %v351 = vld [vmem:[%s259 + $0xd0] sm:$0xff]
          %v352 = vld [vmem:[%s259 + $0xd8] sm:$0xff]
          %v353 = vld [vmem:[%s259 + $0xe0] sm:$0xff]
          %v354 = vld [vmem:[%s259 + $0xe8] sm:$0xff]
          %v355 = vld [vmem:[%s259 + $0xf0] sm:$0xff]
          %v356 = vld [vmem:[%s259 + $0xf8] sm:$0xff]
          %v357 = vld [vmem:[%s259 + $0x100] sm:$0xff]
          %v358 = vld [vmem:[%s259 + $0x108] sm:$0xff]
          %v359 = vld [vmem:[%s259 + $0x110] sm:$0xff]
          %v360 = vld [vmem:[%s259 + $0x118] sm:$0xff]
          %v361 = vld [vmem:[%s259 + $0x120] sm:$0xff]
          %v362 = vld [vmem:[%s259 + $0x128] sm:$0xff]
          %v363 = vld [vmem:[%s259 + $0x130] sm:$0xff]
          %v364 = vld [vmem:[%s259 + $0x138] sm:$0xff]
          %v365 = vld [vmem:[%s259 + $0x140] sm:$0xff]
          %v366 = vld [vmem:[%s259 + $0x148] sm:$0xff]
          %v367 = vld [vmem:[%s259 + $0x150] sm:$0xff]
          %v368 = vld [vmem:[%s259 + $0x158] sm:$0xff]
          %v369 = vld [vmem:[%s259 + $0x160] sm:$0xff]
          %v370 = vld [vmem:[%s259 + $0x168] sm:$0xff]
          %v371 = vld [vmem:[%s259 + $0x170] sm:$0xff]
          %v372 = vld [vmem:[%s259 + $0x178] sm:$0xff]
          %v373 = vld [vmem:[%s259 + $0x180] sm:$0xff]
          %v374 = vld [vmem:[%s259 + $0x188] sm:$0xff]
          %v375 = vld [vmem:[%s259 + $0x190] sm:$0xff]
          %v376 = vld [vmem:[%s259 + $0x198] sm:$0xff]
          %v377 = vld [vmem:[%s259 + $0x1a0] sm:$0xff]
          %v378 = vld [vmem:[%s259 + $0x1a8] sm:$0xff]
          %v379 = vld [vmem:[%s259 + $0x1b0] sm:$0xff]
          %v380 = vld [vmem:[%s259 + $0x1b8] sm:$0xff]
          %v381 = vld [vmem:[%s259 + $0x1c0] sm:$0xff]
          %v382 = vld [vmem:[%s259 + $0x1c8] sm:$0xff]
          %v383 = vld [vmem:[%s259 + $0x1d0] sm:$0xff]
          %v384 = vld [vmem:[%s259 + $0x1d8] sm:$0xff]
          %v385 = vld [vmem:[%s259 + $0x1e0] sm:$0xff]
          %v386 = vld [vmem:[%s259 + $0x1e8] sm:$0xff]
          %v387 = vld [vmem:[%s259 + $0x1f0] sm:$0xff]
          %v388 = vld [vmem:[%s259 + $0x1f8] sm:$0xff]
          %v389 = vmul.f32 %v325, %v325
          %v390 = vmul.f32 %v326, %v326
          %v391 = vmul.f32 %v327, %v327
          %v392 = vmul.f32 %v328, %v328
          %v393 = vmul.f32 %v329, %v329
          %v394 = vmul.f32 %v330, %v330
          %v395 = vmul.f32 %v331, %v331
          %v396 = vmul.f32 %v332, %v332
          %v397 = vmul.f32 %v333, %v333
          %v398 = vmul.f32 %v334, %v334
          %v399 = vmul.f32 %v335, %v335
          %v400 = vmul.f32 %v336, %v336
          %v401 = vmul.f32 %v337, %v337
          %v402 = vmul.f32 %v338, %v338
          %v403 = vmul.f32 %v339, %v339
          %v404 = vmul.f32 %v340, %v340
          %v405 = vmul.f32 %v341, %v341
          %v406 = vmul.f32 %v342, %v342
          %v407 = vmul.f32 %v343, %v343
          %v408 = vmul.f32 %v344, %v344
          %v409 = vmul.f32 %v345, %v345
          %v410 = vmul.f32 %v346, %v346
          %v411 = vmul.f32 %v347, %v347
          %v412 = vmul.f32 %v348, %v348
          %v413 = vmul.f32 %v349, %v349
          %v414 = vmul.f32 %v350, %v350
          %v415 = vmul.f32 %v351, %v351
          %v416 = vmul.f32 %v352, %v352
          %v417 = vmul.f32 %v353, %v353
          %v418 = vmul.f32 %v354, %v354
          %v419 = vmul.f32 %v355, %v355
          %v420 = vmul.f32 %v356, %v356
          %v421 = vmul.f32 %v357, %v357
          %v422 = vmul.f32 %v358, %v358
          %v423 = vmul.f32 %v359, %v359
          %v424 = vmul.f32 %v360, %v360
          %v425 = vmul.f32 %v361, %v361
          %v426 = vmul.f32 %v362, %v362
          %v427 = vmul.f32 %v363, %v363
          %v428 = vmul.f32 %v364, %v364
          %v429 = vmul.f32 %v365, %v365
          %v430 = vmul.f32 %v366, %v366
          %v431 = vmul.f32 %v367, %v367
          %v432 = vmul.f32 %v368, %v368
          %v433 = vmul.f32 %v369, %v369
          %v434 = vmul.f32 %v370, %v370
          %v435 = vmul.f32 %v371, %v371
          %v436 = vmul.f32 %v372, %v372
          %v437 = vmul.f32 %v373, %v373
          %v438 = vmul.f32 %v374, %v374
          %v439 = vmul.f32 %v375, %v375
          %v440 = vmul.f32 %v376, %v376
          %v441 = vmul.f32 %v377, %v377
          %v442 = vmul.f32 %v378, %v378
          %v443 = vmul.f32 %v379, %v379
          %v444 = vmul.f32 %v380, %v380
          %v445 = vmul.f32 %v381, %v381
          %v446 = vmul.f32 %v382, %v382
          %v447 = vmul.f32 %v383, %v383
          %v448 = vmul.f32 %v384, %v384
          %v449 = vmul.f32 %v385, %v385
          %v450 = vmul.f32 %v386, %v386
          %v451 = vmul.f32 %v387, %v387
          %v452 = vmul.f32 %v388, %v388
          %v453 = vadd.f32 %v389, %v390
          %454 = vadd.xlane.f32.xlu0 %v453
          %v455 = vpop.xlane.xlu0 %454
          %v456 = vadd.f32 %v391, %v392
          %457 = vadd.xlane.f32.xlu0 %v456
          %v458 = vpop.xlane.xlu0 %457
          %v459 = vadd.f32 %v393, %v394
          %460 = vadd.xlane.f32.xlu0 %v459
          %v461 = vpop.xlane.xlu0 %460
          %v462 = vadd.f32 %v395, %v396
          %463 = vadd.xlane.f32.xlu0 %v462
          %v464 = vpop.xlane.xlu0 %463
          %v465 = vadd.f32 %v397, %v398
          %466 = vadd.xlane.f32.xlu0 %v465
          %v467 = vpop.xlane.xlu0 %466
          %v468 = vadd.f32 %v399, %v400
          %469 = vadd.xlane.f32.xlu0 %v468
          %v470 = vpop.xlane.xlu0 %469
          %v471 = vadd.f32 %v401, %v402
          %472 = vadd.xlane.f32.xlu0 %v471
          %v473 = vpop.xlane.xlu0 %472
          %v474 = vadd.f32 %v403, %v404
          %475 = vadd.xlane.f32.xlu0 %v474
          %v476 = vpop.xlane.xlu0 %475
          %v477 = vadd.f32 %v405, %v406
          %478 = vadd.xlane.f32.xlu0 %v477
          %v479 = vpop.xlane.xlu0 %478
          %v480 = vadd.f32 %v407, %v408
          %481 = vadd.xlane.f32.xlu0 %v480
          %v482 = vpop.xlane.xlu0 %481
          %v483 = vadd.f32 %v409, %v410
          %484 = vadd.xlane.f32.xlu0 %v483
          %v485 = vpop.xlane.xlu0 %484
          %v486 = vadd.f32 %v411, %v412
          %487 = vadd.xlane.f32.xlu0 %v486
          %v488 = vpop.xlane.xlu0 %487
          %v489 = vadd.f32 %v413, %v414
          %490 = vadd.xlane.f32.xlu0 %v489
          %v491 = vpop.xlane.xlu0 %490
          %v492 = vadd.f32 %v415, %v416
          %493 = vadd.xlane.f32.xlu0 %v492
          %v494 = vpop.xlane.xlu0 %493
          %v495 = vadd.f32 %v417, %v418
          %496 = vadd.xlane.f32.xlu0 %v495
          %v497 = vpop.xlane.xlu0 %496
          %v498 = vadd.f32 %v419, %v420
          %499 = vadd.xlane.f32.xlu0 %v498
          %v500 = vpop.xlane.xlu0 %499
          %v501 = vadd.f32 %v421, %v422
          %502 = vadd.xlane.f32.xlu0 %v501
          %v503 = vpop.xlane.xlu0 %502
          %v504 = vadd.f32 %v423, %v424
          %505 = vadd.xlane.f32.xlu0 %v504
          %v506 = vpop.xlane.xlu0 %505
          %v507 = vadd.f32 %v425, %v426
          %508 = vadd.xlane.f32.xlu0 %v507
          %v509 = vpop.xlane.xlu0 %508
          %v510 = vadd.f32 %v427, %v428
          %511 = vadd.xlane.f32.xlu0 %v510
          %v512 = vpop.xlane.xlu0 %511
          %v513 = vadd.f32 %v429, %v430
          %514 = vadd.xlane.f32.xlu0 %v513
          %v515 = vpop.xlane.xlu0 %514
          %v516 = vadd.f32 %v431, %v432
          %517 = vadd.xlane.f32.xlu0 %v516
          %v518 = vpop.xlane.xlu0 %517
          %v519 = vadd.f32 %v433, %v434
          %520 = vadd.xlane.f32.xlu0 %v519
          %v521 = vpop.xlane.xlu0 %520
          %v522 = vadd.f32 %v435, %v436
          %523 = vadd.xlane.f32.xlu0 %v522
          %v524 = vpop.xlane.xlu0 %523
          %v525 = vadd.f32 %v437, %v438
          %526 = vadd.xlane.f32.xlu0 %v525
          %v527 = vpop.xlane.xlu0 %526
          %v528 = vadd.f32 %v439, %v440
          %529 = vadd.xlane.f32.xlu0 %v528
          %v530 = vpop.xlane.xlu0 %529
          %v531 = vadd.f32 %v441, %v442
          %532 = vadd.xlane.f32.xlu0 %v531
          %v533 = vpop.xlane.xlu0 %532
          %v534 = vadd.f32 %v443, %v444
          %535 = vadd.xlane.f32.xlu0 %v534
          %v536 = vpop.xlane.xlu0 %535
          %v537 = vadd.f32 %v445, %v446
          %538 = vadd.xlane.f32.xlu0 %v537
          %v539 = vpop.xlane.xlu0 %538
          %v540 = vadd.f32 %v447, %v448
          %541 = vadd.xlane.f32.xlu0 %v540
          %v542 = vpop.xlane.xlu0 %541
          %v543 = vadd.f32 %v449, %v450
          %544 = vadd.xlane.f32.xlu0 %v543
          %v545 = vpop.xlane.xlu0 %544
          %v546 = vadd.f32 %v451, %v452
          %547 = vadd.xlane.f32.xlu0 %v546
          %v548 = vpop.xlane.xlu0 %547
          %v549 = vrcp.pop 256.0
          %v550 = vmul.f32 %v455, %v549
          %v551 = vmul.f32 %v458, %v549
          %v552 = vmul.f32 %v461, %v549
          %v553 = vmul.f32 %v464, %v549
          %v554 = vmul.f32 %v467, %v549
          %v555 = vmul.f32 %v470, %v549
          %v556 = vmul.f32 %v473, %v549
          %v557 = vmul.f32 %v476, %v549
          %v558 = vmul.f32 %v479, %v549
          %v559 = vmul.f32 %v482, %v549
          %v560 = vmul.f32 %v485, %v549
          %v561 = vmul.f32 %v488, %v549
          %v562 = vmul.f32 %v491, %v549
          %v563 = vmul.f32 %v494, %v549
          %v564 = vmul.f32 %v497, %v549
          %v565 = vmul.f32 %v500, %v549
          %v566 = vmul.f32 %v503, %v549
          %v567 = vmul.f32 %v506, %v549
          %v568 = vmul.f32 %v509, %v549
          %v569 = vmul.f32 %v512, %v549
          %v570 = vmul.f32 %v515, %v549
          %v571 = vmul.f32 %v518, %v549
          %v572 = vmul.f32 %v521, %v549
          %v573 = vmul.f32 %v524, %v549
          %v574 = vmul.f32 %v527, %v549
          %v575 = vmul.f32 %v530, %v549
          %v576 = vmul.f32 %v533, %v549
          %v577 = vmul.f32 %v536, %v549
          %v578 = vmul.f32 %v539, %v549
          %v579 = vmul.f32 %v542, %v549
          %v580 = vmul.f32 %v545, %v549
          %v581 = vmul.f32 %v548, %v549
          %v582 = vadd.f32 %v550, 1e-06
          %v583 = vadd.f32 %v551, 1e-06
          %v584 = vadd.f32 %v552, 1e-06
          %v585 = vadd.f32 %v553, 1e-06
          %v586 = vadd.f32 %v554, 1e-06
          %v587 = vadd.f32 %v555, 1e-06
          %v588 = vadd.f32 %v556, 1e-06
          %v589 = vadd.f32 %v557, 1e-06
          %v590 = vadd.f32 %v558, 1e-06
          %v591 = vadd.f32 %v559, 1e-06
          %v592 = vadd.f32 %v560, 1e-06
          %v593 = vadd.f32 %v561, 1e-06
          %v594 = vadd.f32 %v562, 1e-06
          %v595 = vadd.f32 %v563, 1e-06
          %v596 = vadd.f32 %v564, 1e-06
          %v597 = vadd.f32 %v565, 1e-06
          %v598 = vadd.f32 %v566, 1e-06
          %v599 = vadd.f32 %v567, 1e-06
          %v600 = vadd.f32 %v568, 1e-06
          %v601 = vadd.f32 %v569, 1e-06
          %v602 = vadd.f32 %v570, 1e-06
          %v603 = vadd.f32 %v571, 1e-06
          %v604 = vadd.f32 %v572, 1e-06
          %v605 = vadd.f32 %v573, 1e-06
          %v606 = vadd.f32 %v574, 1e-06
          %v607 = vadd.f32 %v575, 1e-06
          %v608 = vadd.f32 %v576, 1e-06
          %v609 = vadd.f32 %v577, 1e-06
          %v610 = vadd.f32 %v578, 1e-06
          %v611 = vadd.f32 %v579, 1e-06
          %v612 = vadd.f32 %v580, 1e-06
          %v613 = vadd.f32 %v581, 1e-06
          %v614 = vrsqrt.pop %v582
          %v615 = vrsqrt.pop %v583
          %v616 = vrsqrt.pop %v584
          %v617 = vrsqrt.pop %v585
          %v618 = vrsqrt.pop %v586
          %v619 = vrsqrt.pop %v587
          %v620 = vrsqrt.pop %v588
          %v621 = vrsqrt.pop %v589
          %v622 = vrsqrt.pop %v590
          %v623 = vrsqrt.pop %v591
          %v624 = vrsqrt.pop %v592
          %v625 = vrsqrt.pop %v593
          %v626 = vrsqrt.pop %v594
          %v627 = vrsqrt.pop %v595
          %v628 = vrsqrt.pop %v596
          %v629 = vrsqrt.pop %v597
          %v630 = vrsqrt.pop %v598
          %v631 = vrsqrt.pop %v599
          %v632 = vrsqrt.pop %v600
          %v633 = vrsqrt.pop %v601
          %v634 = vrsqrt.pop %v602
          %v635 = vrsqrt.pop %v603
          %v636 = vrsqrt.pop %v604
          %v637 = vrsqrt.pop %v605
          %v638 = vrsqrt.pop %v606
          %v639 = vrsqrt.pop %v607
          %v640 = vrsqrt.pop %v608
          %v641 = vrsqrt.pop %v609
          %v642 = vrsqrt.pop %v610
          %v643 = vrsqrt.pop %v611
          %v644 = vrsqrt.pop %v612
          %v645 = vrsqrt.pop %v613
          %v646 = vmul.f32 %v325, %v614
          %v647 = vmul.f32 %v326, %v614
          %v648 = vmul.f32 %v327, %v615
          %v649 = vmul.f32 %v328, %v615
          %v650 = vmul.f32 %v329, %v616
          %v651 = vmul.f32 %v330, %v616
          %v652 = vmul.f32 %v331, %v617
          %v653 = vmul.f32 %v332, %v617
          %v654 = vmul.f32 %v333, %v618
          %v655 = vmul.f32 %v334, %v618
          %v656 = vmul.f32 %v335, %v619
          %v657 = vmul.f32 %v336, %v619
          %v658 = vmul.f32 %v337, %v620
          %v659 = vmul.f32 %v338, %v620
          %v660 = vmul.f32 %v339, %v621
          %v661 = vmul.f32 %v340, %v621
          %v662 = vmul.f32 %v341, %v622
          %v663 = vmul.f32 %v342, %v622
          %v664 = vmul.f32 %v343, %v623
          %v665 = vmul.f32 %v344, %v623
          %v666 = vmul.f32 %v345, %v624
          %v667 = vmul.f32 %v346, %v624
          %v668 = vmul.f32 %v347, %v625
          %v669 = vmul.f32 %v348, %v625
          %v670 = vmul.f32 %v349, %v626
          %v671 = vmul.f32 %v350, %v626
          %v672 = vmul.f32 %v351, %v627
          %v673 = vmul.f32 %v352, %v627
          %v674 = vmul.f32 %v353, %v628
          %v675 = vmul.f32 %v354, %v628
          %v676 = vmul.f32 %v355, %v629
          %v677 = vmul.f32 %v356, %v629
          %v678 = vmul.f32 %v357, %v630
          %v679 = vmul.f32 %v358, %v630
          %v680 = vmul.f32 %v359, %v631
          %v681 = vmul.f32 %v360, %v631
          %v682 = vmul.f32 %v361, %v632
          %v683 = vmul.f32 %v362, %v632
          %v684 = vmul.f32 %v363, %v633
          %v685 = vmul.f32 %v364, %v633
          %v686 = vmul.f32 %v365, %v634
          %v687 = vmul.f32 %v366, %v634
          %v688 = vmul.f32 %v367, %v635
          %v689 = vmul.f32 %v368, %v635
          %v690 = vmul.f32 %v369, %v636
          %v691 = vmul.f32 %v370, %v636
          %v692 = vmul.f32 %v371, %v637
          %v693 = vmul.f32 %v372, %v637
          %v694 = vmul.f32 %v373, %v638
          %v695 = vmul.f32 %v374, %v638
          %v696 = vmul.f32 %v375, %v639
          %v697 = vmul.f32 %v376, %v639
          %v698 = vmul.f32 %v377, %v640
          %v699 = vmul.f32 %v378, %v640
          %v700 = vmul.f32 %v379, %v641
          %v701 = vmul.f32 %v380, %v641
          %v702 = vmul.f32 %v381, %v642
          %v703 = vmul.f32 %v382, %v642
          %v704 = vmul.f32 %v383, %v643
          %v705 = vmul.f32 %v384, %v643
          %v706 = vmul.f32 %v385, %v644
          %v707 = vmul.f32 %v386, %v644
          %v708 = vmul.f32 %v387, %v645
          %v709 = vmul.f32 %v388, %v645
          %v710 = vld [vmem:[#allocation6] sm:$0x3]
          %v712 = vlaneseq
          %v713 = vshrl.u32 %v712, 7
          %v714 = vsub.s32 0, %v713
          %v715 = vrot.slane %v710, %v714
          %v716 = vlaneseq
          %v717 = vshrl.u32 %v716, 7
          %v718 = vsub.s32 1, %v717
          %v719 = vrot.slane %v710, %v718
          %v722 = vmul.f32 %v646, %v715
          %v723 = vmul.f32 %v647, %v719
          %v724 = vmul.f32 %v648, %v715
          %v725 = vmul.f32 %v649, %v719
          %v726 = vmul.f32 %v650, %v715
          %v727 = vmul.f32 %v651, %v719
          %v728 = vmul.f32 %v652, %v715
          %v729 = vmul.f32 %v653, %v719
          %v730 = vmul.f32 %v654, %v715
          %v731 = vmul.f32 %v655, %v719
          %v732 = vmul.f32 %v656, %v715
          %v733 = vmul.f32 %v657, %v719
          %v734 = vmul.f32 %v658, %v715
          %v735 = vmul.f32 %v659, %v719
          %v736 = vmul.f32 %v660, %v715
          %v737 = vmul.f32 %v661, %v719
          %v738 = vmul.f32 %v662, %v715
          %v739 = vmul.f32 %v663, %v719
          %v740 = vmul.f32 %v664, %v715
          %v741 = vmul.f32 %v665, %v719
          %v742 = vmul.f32 %v666, %v715
          %v743 = vmul.f32 %v667, %v719
          %v744 = vmul.f32 %v668, %v715
          %v745 = vmul.f32 %v669, %v719
          %v746 = vmul.f32 %v670, %v715
          %v747 = vmul.f32 %v671, %v719
          %v748 = vmul.f32 %v672, %v715
          %v749 = vmul.f32 %v673, %v719
          %v750 = vmul.f32 %v674, %v715
          %v751 = vmul.f32 %v675, %v719
          %v752 = vmul.f32 %v676, %v715
          %v753 = vmul.f32 %v677, %v719
          %v754 = vmul.f32 %v678, %v715
          %v755 = vmul.f32 %v679, %v719
          %v756 = vmul.f32 %v680, %v715
          %v757 = vmul.f32 %v681, %v719
          %v758 = vmul.f32 %v682, %v715
          %v759 = vmul.f32 %v683, %v719
          %v760 = vmul.f32 %v684, %v715
          %v761 = vmul.f32 %v685, %v719
          %v762 = vmul.f32 %v686, %v715
          %v763 = vmul.f32 %v687, %v719
          %v764 = vmul.f32 %v688, %v715
          %v765 = vmul.f32 %v689, %v719
          %v766 = vmul.f32 %v690, %v715
          %v767 = vmul.f32 %v691, %v719
          %v768 = vmul.f32 %v692, %v715
          %v769 = vmul.f32 %v693, %v719
          %v770 = vmul.f32 %v694, %v715
          %v771 = vmul.f32 %v695, %v719
          %v772 = vmul.f32 %v696, %v715
          %v773 = vmul.f32 %v697, %v719
          %v774 = vmul.f32 %v698, %v715
          %v775 = vmul.f32 %v699, %v719
          %v776 = vmul.f32 %v700, %v715
          %v777 = vmul.f32 %v701, %v719
          %v778 = vmul.f32 %v702, %v715
          %v779 = vmul.f32 %v703, %v719
          %v780 = vmul.f32 %v704, %v715
          %v781 = vmul.f32 %v705, %v719
          %v782 = vmul.f32 %v706, %v715
          %v783 = vmul.f32 %v707, %v719
          %v784 = vmul.f32 %v708, %v715
          %v785 = vmul.f32 %v709, %v719
          %v786 = vpack.c.bf16 %v724, %v722
          %v787 = vpack.c.bf16 %v725, %v723
          %v788 = vpack.c.bf16 %v728, %v726
          %v789 = vpack.c.bf16 %v729, %v727
          %v790 = vpack.c.bf16 %v732, %v730
          %v791 = vpack.c.bf16 %v733, %v731
          %v792 = vpack.c.bf16 %v736, %v734
          %v793 = vpack.c.bf16 %v737, %v735
          %v794 = vpack.c.bf16 %v740, %v738
          %v795 = vpack.c.bf16 %v741, %v739
          %v796 = vpack.c.bf16 %v744, %v742
          %v797 = vpack.c.bf16 %v745, %v743
          %v798 = vpack.c.bf16 %v748, %v746
          %v799 = vpack.c.bf16 %v749, %v747
          %v800 = vpack.c.bf16 %v752, %v750
          %v801 = vpack.c.bf16 %v753, %v751
          %v802 = vpack.c.bf16 %v756, %v754
          %v803 = vpack.c.bf16 %v757, %v755
          %v804 = vpack.c.bf16 %v760, %v758
          %v805 = vpack.c.bf16 %v761, %v759
          %v806 = vpack.c.bf16 %v764, %v762
          %v807 = vpack.c.bf16 %v765, %v763
          %v808 = vpack.c.bf16 %v768, %v766
          %v809 = vpack.c.bf16 %v769, %v767
          %v810 = vpack.c.bf16 %v772, %v770
          %v811 = vpack.c.bf16 %v773, %v771
          %v812 = vpack.c.bf16 %v776, %v774
          %v813 = vpack.c.bf16 %v777, %v775
          %v814 = vpack.c.bf16 %v780, %v778
          %v815 = vpack.c.bf16 %v781, %v779
          %v816 = vpack.c.bf16 %v784, %v782
          %v817 = vpack.c.bf16 %v785, %v783
          %v850 = vunpack.c.l.b16 %v786
          %v851 = vunpack.c.l.b16 %v787
          %v852 = vunpack.c.h.b16 %v786
          %v853 = vunpack.c.h.b16 %v787
          %v854 = vunpack.c.l.b16 %v788
          %v855 = vunpack.c.l.b16 %v789
          %v856 = vunpack.c.h.b16 %v788
          %v857 = vunpack.c.h.b16 %v789
          %v858 = vunpack.c.l.b16 %v790
          %v859 = vunpack.c.l.b16 %v791
          %v860 = vunpack.c.h.b16 %v790
          %v861 = vunpack.c.h.b16 %v791
          %v862 = vunpack.c.l.b16 %v792
          %v863 = vunpack.c.l.b16 %v793
          %v864 = vunpack.c.h.b16 %v792
          %v865 = vunpack.c.h.b16 %v793
          %v866 = vunpack.c.l.b16 %v794
          %v867 = vunpack.c.l.b16 %v795
          %v868 = vunpack.c.h.b16 %v794
          %v869 = vunpack.c.h.b16 %v795
          %v870 = vunpack.c.l.b16 %v796
          %v871 = vunpack.c.l.b16 %v797
          %v872 = vunpack.c.h.b16 %v796
          %v873 = vunpack.c.h.b16 %v797
          %v874 = vunpack.c.l.b16 %v798
          %v875 = vunpack.c.l.b16 %v799
          %v876 = vunpack.c.h.b16 %v798
          %v877 = vunpack.c.h.b16 %v799
          %v878 = vunpack.c.l.b16 %v800
          %v879 = vunpack.c.l.b16 %v801
          %v880 = vunpack.c.h.b16 %v800
          %v881 = vunpack.c.h.b16 %v801
          %v882 = vunpack.c.l.b16 %v802
          %v883 = vunpack.c.l.b16 %v803
          %v884 = vunpack.c.h.b16 %v802
          %v885 = vunpack.c.h.b16 %v803
          %v886 = vunpack.c.l.b16 %v804
          %v887 = vunpack.c.l.b16 %v805
          %v888 = vunpack.c.h.b16 %v804
          %v889 = vunpack.c.h.b16 %v805
          %v890 = vunpack.c.l.b16 %v806
          %v891 = vunpack.c.l.b16 %v807
          %v892 = vunpack.c.h.b16 %v806
          %v893 = vunpack.c.h.b16 %v807
          %v894 = vunpack.c.l.b16 %v808
          %v895 = vunpack.c.l.b16 %v809
          %v896 = vunpack.c.h.b16 %v808
          %v897 = vunpack.c.h.b16 %v809
          %v898 = vunpack.c.l.b16 %v810
          %v899 = vunpack.c.l.b16 %v811
          %v900 = vunpack.c.h.b16 %v810
          %v901 = vunpack.c.h.b16 %v811
          %v902 = vunpack.c.l.b16 %v812
          %v903 = vunpack.c.l.b16 %v813
          %v904 = vunpack.c.h.b16 %v812
          %v905 = vunpack.c.h.b16 %v813
          %v906 = vunpack.c.l.b16 %v814
          %v907 = vunpack.c.l.b16 %v815
          %v908 = vunpack.c.h.b16 %v814
          %v909 = vunpack.c.h.b16 %v815
          %v910 = vunpack.c.l.b16 %v816
          %v911 = vunpack.c.l.b16 %v817
          %v912 = vunpack.c.h.b16 %v816
          %v913 = vunpack.c.h.b16 %v817
          %v914 = vpack.c.b16 %v851, %v850
          %v915 = vpack.c.b16 %v853, %v852
          %v916 = vpack.c.b16 %v855, %v854
          %v917 = vpack.c.b16 %v857, %v856
          %v918 = vpack.c.b16 %v859, %v858
          %v919 = vpack.c.b16 %v861, %v860
          %v920 = vpack.c.b16 %v863, %v862
          %v921 = vpack.c.b16 %v865, %v864
          %v922 = vpack.c.b16 %v867, %v866
          %v923 = vpack.c.b16 %v869, %v868
          %v924 = vpack.c.b16 %v871, %v870
          %v925 = vpack.c.b16 %v873, %v872
          %v926 = vpack.c.b16 %v875, %v874
          %v927 = vpack.c.b16 %v877, %v876
          %v928 = vpack.c.b16 %v879, %v878
          %v929 = vpack.c.b16 %v881, %v880
          %v930 = vpack.c.b16 %v883, %v882
          %v931 = vpack.c.b16 %v885, %v884
          %v932 = vpack.c.b16 %v887, %v886
          %v933 = vpack.c.b16 %v889, %v888
          %v934 = vpack.c.b16 %v891, %v890
          %v935 = vpack.c.b16 %v893, %v892
          %v936 = vpack.c.b16 %v895, %v894
          %v937 = vpack.c.b16 %v897, %v896
          %v938 = vpack.c.b16 %v899, %v898
          %v939 = vpack.c.b16 %v901, %v900
          %v940 = vpack.c.b16 %v903, %v902
          %v941 = vpack.c.b16 %v905, %v904
          %v942 = vpack.c.b16 %v907, %v906
          %v943 = vpack.c.b16 %v909, %v908
          %v944 = vpack.c.b16 %v911, %v910
          %v945 = vpack.c.b16 %v913, %v912
          %978 = vst [vmem:[#allocation2] sm:$0xff] %v914
          %979 = vst [vmem:[#allocation2 + $0x8] sm:$0xff] %v915
          %980 = vst [vmem:[#allocation2 + $0x10] sm:$0xff] %v916
          %981 = vst [vmem:[#allocation2 + $0x18] sm:$0xff] %v917
          %982 = vst [vmem:[#allocation2 + $0x20] sm:$0xff] %v918
          %983 = vst [vmem:[#allocation2 + $0x28] sm:$0xff] %v919
          %984 = vst [vmem:[#allocation2 + $0x30] sm:$0xff] %v920
          %985 = vst [vmem:[#allocation2 + $0x38] sm:$0xff] %v921
          %986 = vst [vmem:[#allocation2 + $0x40] sm:$0xff] %v922
          %987 = vst [vmem:[#allocation2 + $0x48] sm:$0xff] %v923
          %988 = vst [vmem:[#allocation2 + $0x50] sm:$0xff] %v924
          %989 = vst [vmem:[#allocation2 + $0x58] sm:$0xff] %v925
          %990 = vst [vmem:[#allocation2 + $0x60] sm:$0xff] %v926
          %991 = vst [vmem:[#allocation2 + $0x68] sm:$0xff] %v927
          %992 = vst [vmem:[#allocation2 + $0x70] sm:$0xff] %v928
          %993 = vst [vmem:[#allocation2 + $0x78] sm:$0xff] %v929
          %994 = vst [vmem:[#allocation2 + $0x80] sm:$0xff] %v930
          %995 = vst [vmem:[#allocation2 + $0x88] sm:$0xff] %v931
          %996 = vst [vmem:[#allocation2 + $0x90] sm:$0xff] %v932
          %997 = vst [vmem:[#allocation2 + $0x98] sm:$0xff] %v933
          %998 = vst [vmem:[#allocation2 + $0xa0] sm:$0xff] %v934
          %999 = vst [vmem:[#allocation2 + $0xa8] sm:$0xff] %v935
          %1000 = vst [vmem:[#allocation2 + $0xb0] sm:$0xff] %v936
          %1001 = vst [vmem:[#allocation2 + $0xb8] sm:$0xff] %v937
          %1002 = vst [vmem:[#allocation2 + $0xc0] sm:$0xff] %v938
          %1003 = vst [vmem:[#allocation2 + $0xc8] sm:$0xff] %v939
          %1004 = vst [vmem:[#allocation2 + $0xd0] sm:$0xff] %v940
          %1005 = vst [vmem:[#allocation2 + $0xd8] sm:$0xff] %v941
          %1006 = vst [vmem:[#allocation2 + $0xe0] sm:$0xff] %v942
          %1007 = vst [vmem:[#allocation2 + $0xe8] sm:$0xff] %v943
          %1008 = vst [vmem:[#allocation2 + $0xf0] sm:$0xff] %v944
          %1009 = vst [vmem:[#allocation2 + $0xf8] sm:$0xff] %v945
        $region56: #{tpu_custom_call.1} parent=35 // pred_fallthru
          _
        %v1010 = vld [vmem:[#allocation2] sm:$0xff]
        %v1011 = vld [vmem:[#allocation2 + $0x8] sm:$0xff]
        %v1012 = vld [vmem:[#allocation2 + $0x10] sm:$0xff]
        %v1013 = vld [vmem:[#allocation2 + $0x18] sm:$0xff]
        %v1014 = vld [vmem:[#allocation2 + $0x20] sm:$0xff]
        %v1015 = vld [vmem:[#allocation2 + $0x28] sm:$0xff]
        %v1016 = vld [vmem:[#allocation2 + $0x30] sm:$0xff]
        %v1017 = vld [vmem:[#allocation2 + $0x38] sm:$0xff]
        %v1018 = vld [vmem:[#allocation2 + $0x40] sm:$0xff]
        %v1019 = vld [vmem:[#allocation2 + $0x48] sm:$0xff]
        %v1020 = vld [vmem:[#allocation2 + $0x50] sm:$0xff]
        %v1021 = vld [vmem:[#allocation2 + $0x58] sm:$0xff]
        %v1022 = vld [vmem:[#allocation2 + $0x60] sm:$0xff]
        %v1023 = vld [vmem:[#allocation2 + $0x68] sm:$0xff]
        %v1024 = vld [vmem:[#allocation2 + $0x70] sm:$0xff]
        %v1025 = vld [vmem:[#allocation2 + $0x78] sm:$0xff]
        %v1026 = vld [vmem:[#allocation2 + $0x80] sm:$0xff]
        %v1027 = vld [vmem:[#allocation2 + $0x88] sm:$0xff]
        %v1028 = vld [vmem:[#allocation2 + $0x90] sm:$0xff]
        %v1029 = vld [vmem:[#allocation2 + $0x98] sm:$0xff]
        %v1030 = vld [vmem:[#allocation2 + $0xa0] sm:$0xff]
        %v1031 = vld [vmem:[#allocation2 + $0xa8] sm:$0xff]
        %v1032 = vld [vmem:[#allocation2 + $0xb0] sm:$0xff]
        %v1033 = vld [vmem:[#allocation2 + $0xb8] sm:$0xff]
        %v1034 = vld [vmem:[#allocation2 + $0xc0] sm:$0xff]
        %v1035 = vld [vmem:[#allocation2 + $0xc8] sm:$0xff]
        %v1036 = vld [vmem:[#allocation2 + $0xd0] sm:$0xff]
        %v1037 = vld [vmem:[#allocation2 + $0xd8] sm:$0xff]
        %v1038 = vld [vmem:[#allocation2 + $0xe0] sm:$0xff]
        %v1039 = vld [vmem:[#allocation2 + $0xe8] sm:$0xff]
        %v1040 = vld [vmem:[#allocation2 + $0xf0] sm:$0xff]
        %v1041 = vld [vmem:[#allocation2 + $0xf8] sm:$0xff]
        %v1042 = vld [vmem:[%s272] sm:$0xff]
        %v1043 = vld [vmem:[%s272 + $0x8] sm:$0xff]
        %v1044 = vld [vmem:[%s272 + $0x10] sm:$0xff]
        %v1045 = vld [vmem:[%s272 + $0x18] sm:$0xff]
        %v1046 = vld [vmem:[%s272 + $0x20] sm:$0xff]
        %v1047 = vld [vmem:[%s272 + $0x28] sm:$0xff]
        %v1048 = vld [vmem:[%s272 + $0x30] sm:$0xff]
        %v1049 = vld [vmem:[%s272 + $0x38] sm:$0xff]
        %v1050 = vld [vmem:[%s272 + $0x40] sm:$0xff]
        %v1051 = vld [vmem:[%s272 + $0x48] sm:$0xff]
        %v1052 = vld [vmem:[%s272 + $0x50] sm:$0xff]
        %v1053 = vld [vmem:[%s272 + $0x58] sm:$0xff]
        %v1054 = vld [vmem:[%s272 + $0x60] sm:$0xff]
        %v1055 = vld [vmem:[%s272 + $0x68] sm:$0xff]
        %v1056 = vld [vmem:[%s272 + $0x70] sm:$0xff]
        %v1057 = vld [vmem:[%s272 + $0x78] sm:$0xff]
        %v1058 = vld [vmem:[%s272 + $0x80] sm:$0xff]
        %v1059 = vld [vmem:[%s272 + $0x88] sm:$0xff]
        %v1060 = vld [vmem:[%s272 + $0x90] sm:$0xff]
        %v1061 = vld [vmem:[%s272 + $0x98] sm:$0xff]
        %v1062 = vld [vmem:[%s272 + $0xa0] sm:$0xff]
        %v1063 = vld [vmem:[%s272 + $0xa8] sm:$0xff]
        %v1064 = vld [vmem:[%s272 + $0xb0] sm:$0xff]
        %v1065 = vld [vmem:[%s272 + $0xb8] sm:$0xff]
        %v1066 = vld [vmem:[%s272 + $0xc0] sm:$0xff]
        %v1067 = vld [vmem:[%s272 + $0xc8] sm:$0xff]
        %v1068 = vld [vmem:[%s272 + $0xd0] sm:$0xff]
        %v1069 = vld [vmem:[%s272 + $0xd8] sm:$0xff]
        %v1070 = vld [vmem:[%s272 + $0xe0] sm:$0xff]
        %v1071 = vld [vmem:[%s272 + $0xe8] sm:$0xff]
        %v1072 = vld [vmem:[%s272 + $0xf0] sm:$0xff]
        %v1073 = vld [vmem:[%s272 + $0xf8] sm:$0xff]
        %v1074 = vld [vmem:[%s281] sm:$0x3]
        %v1076 = vlaneseq
        %v1077 = vshrl.u32 %v1076, 7
        %v1078 = vsub.s32 0, %v1077
        %v1079 = vrot.slane %v1074, %v1078
        %v1080 = vlaneseq
        %v1081 = vshrl.u32 %v1080, 7
        %v1082 = vsub.s32 1, %v1081
        %v1083 = vrot.slane %v1074, %v1082
        %v1118 = vunpack.c.l.b16 %v1010
        %v1119 = vunpack.c.h.b16 %v1010
        %v1120 = vunpack.c.l.b16 %v1011
        %v1121 = vunpack.c.h.b16 %v1011
        %v1122 = vunpack.c.l.b16 %v1012
        %v1123 = vunpack.c.h.b16 %v1012
        %v1124 = vunpack.c.l.b16 %v1013
        %v1125 = vunpack.c.h.b16 %v1013
        %v1126 = vunpack.c.l.b16 %v1014
        %v1127 = vunpack.c.h.b16 %v1014
        %v1128 = vunpack.c.l.b16 %v1015
        %v1129 = vunpack.c.h.b16 %v1015
        %v1130 = vunpack.c.l.b16 %v1016
        %v1131 = vunpack.c.h.b16 %v1016
        %v1132 = vunpack.c.l.b16 %v1017
        %v1133 = vunpack.c.h.b16 %v1017
        %v1134 = vunpack.c.l.b16 %v1018
        %v1135 = vunpack.c.h.b16 %v1018
        %v1136 = vunpack.c.l.b16 %v1019
        %v1137 = vunpack.c.h.b16 %v1019
        %v1138 = vunpack.c.l.b16 %v1020
        %v1139 = vunpack.c.h.b16 %v1020
        %v1140 = vunpack.c.l.b16 %v1021
        %v1141 = vunpack.c.h.b16 %v1021
        %v1142 = vunpack.c.l.b16 %v1022
        %v1143 = vunpack.c.h.b16 %v1022
        %v1144 = vunpack.c.l.b16 %v1023
        %v1145 = vunpack.c.h.b16 %v1023
        %v1146 = vunpack.c.l.b16 %v1024
        %v1147 = vunpack.c.h.b16 %v1024
        %v1148 = vunpack.c.l.b16 %v1025
        %v1149 = vunpack.c.h.b16 %v1025
        %v1150 = vunpack.c.l.b16 %v1026
        %v1151 = vunpack.c.h.b16 %v1026
        %v1152 = vunpack.c.l.b16 %v1027
        %v1153 = vunpack.c.h.b16 %v1027
        %v1154 = vunpack.c.l.b16 %v1028
        %v1155 = vunpack.c.h.b16 %v1028
        %v1156 = vunpack.c.l.b16 %v1029
        %v1157 = vunpack.c.h.b16 %v1029
        %v1158 = vunpack.c.l.b16 %v1030
        %v1159 = vunpack.c.h.b16 %v1030
        %v1160 = vunpack.c.l.b16 %v1031
        %v1161 = vunpack.c.h.b16 %v1031
        %v1162 = vunpack.c.l.b16 %v1032
        %v1163 = vunpack.c.h.b16 %v1032
        %v1164 = vunpack.c.l.b16 %v1033
        %v1165 = vunpack.c.h.b16 %v1033
        %v1166 = vunpack.c.l.b16 %v1034
        %v1167 = vunpack.c.h.b16 %v1034
        %v1168 = vunpack.c.l.b16 %v1035
        %v1169 = vunpack.c.h.b16 %v1035
        %v1170 = vunpack.c.l.b16 %v1036
        %v1171 = vunpack.c.h.b16 %v1036
        %v1172 = vunpack.c.l.b16 %v1037
        %v1173 = vunpack.c.h.b16 %v1037
        %v1174 = vunpack.c.l.b16 %v1038
        %v1175 = vunpack.c.h.b16 %v1038
        %v1176 = vunpack.c.l.b16 %v1039
        %v1177 = vunpack.c.h.b16 %v1039
        %v1178 = vunpack.c.l.b16 %v1040
        %v1179 = vunpack.c.h.b16 %v1040
        %v1180 = vunpack.c.l.b16 %v1041
        %v1181 = vunpack.c.h.b16 %v1041
        %v1182 = vpack.c.b16 %v1120, %v1118
        %v1183 = vpack.c.b16 %v1121, %v1119
        %v1184 = vpack.c.b16 %v1124, %v1122
        %v1185 = vpack.c.b16 %v1125, %v1123
        %v1186 = vpack.c.b16 %v1128, %v1126
        %v1187 = vpack.c.b16 %v1129, %v1127
        %v1188 = vpack.c.b16 %v1132, %v1130
        %v1189 = vpack.c.b16 %v1133, %v1131
        %v1190 = vpack.c.b16 %v1136, %v1134
        %v1191 = vpack.c.b16 %v1137, %v1135
        %v1192 = vpack.c.b16 %v1140, %v1138
        %v1193 = vpack.c.b16 %v1141, %v1139
        %v1194 = vpack.c.b16 %v1144, %v1142
        %v1195 = vpack.c.b16 %v1145, %v1143
        %v1196 = vpack.c.b16 %v1148, %v1146
        %v1197 = vpack.c.b16 %v1149, %v1147
        %v1198 = vpack.c.b16 %v1152, %v1150
        %v1199 = vpack.c.b16 %v1153, %v1151
        %v1200 = vpack.c.b16 %v1156, %v1154
        %v1201 = vpack.c.b16 %v1157, %v1155
        %v1202 = vpack.c.b16 %v1160, %v1158
        %v1203 = vpack.c.b16 %v1161, %v1159
        %v1204 = vpack.c.b16 %v1164, %v1162
        %v1205 = vpack.c.b16 %v1165, %v1163
        %v1206 = vpack.c.b16 %v1168, %v1166
        %v1207 = vpack.c.b16 %v1169, %v1167
        %v1208 = vpack.c.b16 %v1172, %v1170
        %v1209 = vpack.c.b16 %v1173, %v1171
        %v1210 = vpack.c.b16 %v1176, %v1174
        %v1211 = vpack.c.b16 %v1177, %v1175
        %v1212 = vpack.c.b16 %v1180, %v1178
        %v1213 = vpack.c.b16 %v1181, %v1179
        %v1278 = vunpack.c.l.b16 %v1042
        %v1279 = vunpack.c.h.b16 %v1042
        %v1280 = vunpack.c.l.b16 %v1043
        %v1281 = vunpack.c.h.b16 %v1043
        %v1282 = vunpack.c.l.b16 %v1044
        %v1283 = vunpack.c.h.b16 %v1044
        %v1284 = vunpack.c.l.b16 %v1045
        %v1285 = vunpack.c.h.b16 %v1045
        %v1286 = vunpack.c.l.b16 %v1046
        %v1287 = vunpack.c.h.b16 %v1046
        %v1288 = vunpack.c.l.b16 %v1047
        %v1289 = vunpack.c.h.b16 %v1047
        %v1290 = vunpack.c.l.b16 %v1048
        %v1291 = vunpack.c.h.b16 %v1048
        %v1292 = vunpack.c.l.b16 %v1049
        %v1293 = vunpack.c.h.b16 %v1049
        %v1294 = vunpack.c.l.b16 %v1050
        %v1295 = vunpack.c.h.b16 %v1050
        %v1296 = vunpack.c.l.b16 %v1051
        %v1297 = vunpack.c.h.b16 %v1051
        %v1298 = vunpack.c.l.b16 %v1052
        %v1299 = vunpack.c.h.b16 %v1052
        %v1300 = vunpack.c.l.b16 %v1053
        %v1301 = vunpack.c.h.b16 %v1053
        %v1302 = vunpack.c.l.b16 %v1054
        %v1303 = vunpack.c.h.b16 %v1054
        %v1304 = vunpack.c.l.b16 %v1055
        %v1305 = vunpack.c.h.b16 %v1055
        %v1306 = vunpack.c.l.b16 %v1056
        %v1307 = vunpack.c.h.b16 %v1056
        %v1308 = vunpack.c.l.b16 %v1057
        %v1309 = vunpack.c.h.b16 %v1057
        %v1310 = vunpack.c.l.b16 %v1058
        %v1311 = vunpack.c.h.b16 %v1058
        %v1312 = vunpack.c.l.b16 %v1059
        %v1313 = vunpack.c.h.b16 %v1059
        %v1314 = vunpack.c.l.b16 %v1060
        %v1315 = vunpack.c.h.b16 %v1060
        %v1316 = vunpack.c.l.b16 %v1061
        %v1317 = vunpack.c.h.b16 %v1061
        %v1318 = vunpack.c.l.b16 %v1062
        %v1319 = vunpack.c.h.b16 %v1062
        %v1320 = vunpack.c.l.b16 %v1063
        %v1321 = vunpack.c.h.b16 %v1063
        %v1322 = vunpack.c.l.b16 %v1064
        %v1323 = vunpack.c.h.b16 %v1064
        %v1324 = vunpack.c.l.b16 %v1065
        %v1325 = vunpack.c.h.b16 %v1065
        %v1326 = vunpack.c.l.b16 %v1066
        %v1327 = vunpack.c.h.b16 %v1066
        %v1328 = vunpack.c.l.b16 %v1067
        %v1329 = vunpack.c.h.b16 %v1067
        %v1330 = vunpack.c.l.b16 %v1068
        %v1331 = vunpack.c.h.b16 %v1068
        %v1332 = vunpack.c.l.b16 %v1069
        %v1333 = vunpack.c.h.b16 %v1069
        %v1334 = vunpack.c.l.b16 %v1070
        %v1335 = vunpack.c.h.b16 %v1070
        %v1336 = vunpack.c.l.b16 %v1071
        %v1337 = vunpack.c.h.b16 %v1071
        %v1338 = vunpack.c.l.b16 %v1072
        %v1339 = vunpack.c.h.b16 %v1072
        %v1340 = vunpack.c.l.b16 %v1073
        %v1341 = vunpack.c.h.b16 %v1073
        %v1342 = vpack.c.b16 %v1280, %v1278
        %v1343 = vpack.c.b16 %v1281, %v1279
        %v1344 = vpack.c.b16 %v1284, %v1282
        %v1345 = vpack.c.b16 %v1285, %v1283
        %v1346 = vpack.c.b16 %v1288, %v1286
        %v1347 = vpack.c.b16 %v1289, %v1287
        %v1348 = vpack.c.b16 %v1292, %v1290
        %v1349 = vpack.c.b16 %v1293, %v1291
        %v1350 = vpack.c.b16 %v1296, %v1294
        %v1351 = vpack.c.b16 %v1297, %v1295
        %v1352 = vpack.c.b16 %v1300, %v1298
        %v1353 = vpack.c.b16 %v1301, %v1299
        %v1354 = vpack.c.b16 %v1304, %v1302
        %v1355 = vpack.c.b16 %v1305, %v1303
        %v1356 = vpack.c.b16 %v1308, %v1306
        %v1357 = vpack.c.b16 %v1309, %v1307
        %v1358 = vpack.c.b16 %v1312, %v1310
        %v1359 = vpack.c.b16 %v1313, %v1311
        %v1360 = vpack.c.b16 %v1316, %v1314
        %v1361 = vpack.c.b16 %v1317, %v1315
        %v1362 = vpack.c.b16 %v1320, %v1318
        %v1363 = vpack.c.b16 %v1321, %v1319
        %v1364 = vpack.c.b16 %v1324, %v1322
        %v1365 = vpack.c.b16 %v1325, %v1323
        %v1366 = vpack.c.b16 %v1328, %v1326
        %v1367 = vpack.c.b16 %v1329, %v1327
        %v1368 = vpack.c.b16 %v1332, %v1330
        %v1369 = vpack.c.b16 %v1333, %v1331
        %v1370 = vpack.c.b16 %v1336, %v1334
        %v1371 = vpack.c.b16 %v1337, %v1335
        %v1372 = vpack.c.b16 %v1340, %v1338
        %v1373 = vpack.c.b16 %v1341, %v1339
        %1406 = vmatprep.subr.bf16.mxu0 %v1357
        %1407 = vmatpush1.bf16.msra.mxu0 %v1356
        %1408 = vmatprep.subr.bf16.mxu0 %v1355
        %1409 = vmatpush1.bf16.msra.mxu0 %v1354
        %1410 = vmatprep.subr.bf16.mxu0 %v1353
        %1411 = vmatpush1.bf16.msra.mxu0 %v1352
        %1412 = vmatprep.subr.bf16.mxu0 %v1351
        %1413 = vmatpush1.bf16.msra.mxu0 %v1350
        %1414 = vmatprep.subr.bf16.mxu0 %v1349
        %1415 = vmatpush1.bf16.msra.mxu0 %v1348
        %1416 = vmatprep.subr.bf16.mxu0 %v1347
        %1417 = vmatpush1.bf16.msra.mxu0 %v1346
        %1418 = vmatprep.subr.bf16.mxu0 %v1345
        %1419 = vmatpush1.bf16.msra.mxu0 %v1344
        %1420 = vmatprep.subr.bf16.mxu0 %v1343
        %1421 = vmatpush1.bf16.msra.mxu0 %v1342
        %1422 = vmatprep.subr.bf16.mxu0 %v1373
        %1423 = vmatpush2.bf16.msra.mxu0 %v1372
        %1424 = vmatprep.subr.bf16.mxu0 %v1371
        %1425 = vmatpush2.bf16.msra.mxu0 %v1370
        %1426 = vmatprep.subr.bf16.mxu0 %v1369
        %1427 = vmatpush2.bf16.msra.mxu0 %v1368
        %1428 = vmatprep.subr.bf16.mxu0 %v1367
        %1429 = vmatpush2.bf16.msra.mxu0 %v1366
        %1430 = vmatprep.subr.bf16.mxu0 %v1365
        %1431 = vmatpush2.bf16.msra.mxu0 %v1364
        %1432 = vmatprep.subr.bf16.mxu0 %v1363
        %1433 = vmatpush2.bf16.msra.mxu0 %v1362
        %1434 = vmatprep.subr.bf16.mxu0 %v1361
        %1435 = vmatpush2.bf16.msra.mxu0 %v1360
        %1436 = vmatprep.subr.bf16.mxu0 %v1359
        %1437 = vmatpush2.bf16.msra.mxu0 %v1358
        %1438 = vmatprep.mubr.bf16.mxu0 %v1183
        %1439 = vmatmul.mubr.bf16.gmra.mxu0 %v1182
        %v1440 = vpop.f32.mrf.mxu0
        %v1441 = vadd.f32 %v1079, %v1440
        %v1442 = vpop.f32.mrf.mxu0
        %v1443 = vadd.f32 %v1083, %v1442
        %v1444 = vpop.f32.mrf.mxu0
        %v1445 = vadd.f32 %v1079, %v1444
        %v1446 = vpop.f32.mrf.mxu0
        %v1447 = vadd.f32 %v1083, %v1446
        %1448 = vmatprep.mubr.bf16.mxu0 %v1185
        %1449 = vmatmul.mubr.bf16.gmra.mxu0 %v1184
        %v1450 = vpop.f32.mrf.mxu0
        %v1451 = vadd.f32 %v1079, %v1450
        %v1452 = vpop.f32.mrf.mxu0
        %v1453 = vadd.f32 %v1083, %v1452
        %v1454 = vpop.f32.mrf.mxu0
        %v1455 = vadd.f32 %v1079, %v1454
        %v1456 = vpop.f32.mrf.mxu0
        %v1457 = vadd.f32 %v1083, %v1456
        %1458 = vmatprep.mubr.bf16.mxu0 %v1187
        %1459 = vmatmul.mubr.bf16.gmra.mxu0 %v1186
        %v1460 = vpop.f32.mrf.mxu0
        %v1461 = vadd.f32 %v1079, %v1460
        %v1462 = vpop.f32.mrf.mxu0
        %v1463 = vadd.f32 %v1083, %v1462
        %v1464 = vpop.f32.mrf.mxu0
        %v1465 = vadd.f32 %v1079, %v1464
        %v1466 = vpop.f32.mrf.mxu0
        %v1467 = vadd.f32 %v1083, %v1466
        %1468 = vmatprep.mubr.bf16.mxu0 %v1189
        %1469 = vmatmul.mubr.bf16.gmra.mxu0 %v1188
        %v1470 = vpop.f32.mrf.mxu0
        %v1471 = vadd.f32 %v1079, %v1470
        %v1472 = vpop.f32.mrf.mxu0
        %v1473 = vadd.f32 %v1083, %v1472
        %v1474 = vpop.f32.mrf.mxu0
        %v1475 = vadd.f32 %v1079, %v1474
        %v1476 = vpop.f32.mrf.mxu0
        %v1477 = vadd.f32 %v1083, %v1476
        %1478 = vmatprep.mubr.bf16.mxu0 %v1191
        %1479 = vmatmul.mubr.bf16.gmra.mxu0 %v1190
        %v1480 = vpop.f32.mrf.mxu0
        %v1481 = vadd.f32 %v1079, %v1480
        %v1482 = vpop.f32.mrf.mxu0
        %v1483 = vadd.f32 %v1083, %v1482
        %v1484 = vpop.f32.mrf.mxu0
        %v1485 = vadd.f32 %v1079, %v1484
        %v1486 = vpop.f32.mrf.mxu0
        %v1487 = vadd.f32 %v1083, %v1486
        %1488 = vmatprep.mubr.bf16.mxu0 %v1193
        %1489 = vmatmul.mubr.bf16.gmra.mxu0 %v1192
        %v1490 = vpop.f32.mrf.mxu0
        %v1491 = vadd.f32 %v1079, %v1490
        %v1492 = vpop.f32.mrf.mxu0
        %v1493 = vadd.f32 %v1083, %v1492
        %v1494 = vpop.f32.mrf.mxu0
        %v1495 = vadd.f32 %v1079, %v1494
        %v1496 = vpop.f32.mrf.mxu0
        %v1497 = vadd.f32 %v1083, %v1496
        %1498 = vmatprep.mubr.bf16.mxu0 %v1195
        %1499 = vmatmul.mubr.bf16.gmra.mxu0 %v1194
        %v1500 = vpop.f32.mrf.mxu0
        %v1501 = vadd.f32 %v1079, %v1500
        %v1502 = vpop.f32.mrf.mxu0
        %v1503 = vadd.f32 %v1083, %v1502
        %v1504 = vpop.f32.mrf.mxu0
        %v1505 = vadd.f32 %v1079, %v1504
        %v1506 = vpop.f32.mrf.mxu0
        %v1507 = vadd.f32 %v1083, %v1506
        %1508 = vmatprep.mubr.bf16.mxu0 %v1197
        %1509 = vmatmul.mubr.bf16.gmra.mxu0 %v1196
        %v1510 = vpop.f32.mrf.mxu0
        %v1511 = vadd.f32 %v1079, %v1510
        %v1512 = vpop.f32.mrf.mxu0
        %v1513 = vadd.f32 %v1083, %v1512
        %v1514 = vpop.f32.mrf.mxu0
        %v1515 = vadd.f32 %v1079, %v1514
        %v1516 = vpop.f32.mrf.mxu0
        %v1517 = vadd.f32 %v1083, %v1516
        %1518 = vmatprep.mubr.bf16.mxu0 %v1199
        %1519 = vmatmul.mubr.bf16.gmra.mxu0 %v1198
        %v1520 = vpop.f32.mrf.mxu0
        %v1521 = vadd.f32 %v1079, %v1520
        %v1522 = vpop.f32.mrf.mxu0
        %v1523 = vadd.f32 %v1083, %v1522
        %v1524 = vpop.f32.mrf.mxu0
        %v1525 = vadd.f32 %v1079, %v1524
        %v1526 = vpop.f32.mrf.mxu0
        %v1527 = vadd.f32 %v1083, %v1526
        %1528 = vmatprep.mubr.bf16.mxu0 %v1201
        %1529 = vmatmul.mubr.bf16.gmra.mxu0 %v1200
        %v1530 = vpop.f32.mrf.mxu0
        %v1531 = vadd.f32 %v1079, %v1530
        %v1532 = vpop.f32.mrf.mxu0
        %v1533 = vadd.f32 %v1083, %v1532
        %v1534 = vpop.f32.mrf.mxu0
        %v1535 = vadd.f32 %v1079, %v1534
        %v1536 = vpop.f32.mrf.mxu0
        %v1537 = vadd.f32 %v1083, %v1536
        %1538 = vmatprep.mubr.bf16.mxu0 %v1203
        %1539 = vmatmul.mubr.bf16.gmra.mxu0 %v1202
        %v1540 = vpop.f32.mrf.mxu0
        %v1541 = vadd.f32 %v1079, %v1540
        %v1542 = vpop.f32.mrf.mxu0
        %v1543 = vadd.f32 %v1083, %v1542
        %v1544 = vpop.f32.mrf.mxu0
        %v1545 = vadd.f32 %v1079, %v1544
        %v1546 = vpop.f32.mrf.mxu0
        %v1547 = vadd.f32 %v1083, %v1546
        %1548 = vmatprep.mubr.bf16.mxu0 %v1205
        %1549 = vmatmul.mubr.bf16.gmra.mxu0 %v1204
        %v1550 = vpop.f32.mrf.mxu0
        %v1551 = vadd.f32 %v1079, %v1550
        %v1552 = vpop.f32.mrf.mxu0
        %v1553 = vadd.f32 %v1083, %v1552
        %v1554 = vpop.f32.mrf.mxu0
        %v1555 = vadd.f32 %v1079, %v1554
        %v1556 = vpop.f32.mrf.mxu0
        %v1557 = vadd.f32 %v1083, %v1556
        %1558 = vmatprep.mubr.bf16.mxu0 %v1207
        %1559 = vmatmul.mubr.bf16.gmra.mxu0 %v1206
        %v1560 = vpop.f32.mrf.mxu0
        %v1561 = vadd.f32 %v1079, %v1560
        %v1562 = vpop.f32.mrf.mxu0
        %v1563 = vadd.f32 %v1083, %v1562
        %v1564 = vpop.f32.mrf.mxu0
        %v1565 = vadd.f32 %v1079, %v1564
        %v1566 = vpop.f32.mrf.mxu0
        %v1567 = vadd.f32 %v1083, %v1566
        %1568 = vmatprep.mubr.bf16.mxu0 %v1209
        %1569 = vmatmul.mubr.bf16.gmra.mxu0 %v1208
        %v1570 = vpop.f32.mrf.mxu0
        %v1571 = vadd.f32 %v1079, %v1570
        %v1572 = vpop.f32.mrf.mxu0
        %v1573 = vadd.f32 %v1083, %v1572
        %v1574 = vpop.f32.mrf.mxu0
        %v1575 = vadd.f32 %v1079, %v1574
        %v1576 = vpop.f32.mrf.mxu0
        %v1577 = vadd.f32 %v1083, %v1576
        %1578 = vmatprep.mubr.bf16.mxu0 %v1211
        %1579 = vmatmul.mubr.bf16.gmra.mxu0 %v1210
        %v1580 = vpop.f32.mrf.mxu0
        %v1581 = vadd.f32 %v1079, %v1580
        %v1582 = vpop.f32.mrf.mxu0
        %v1583 = vadd.f32 %v1083, %v1582
        %v1584 = vpop.f32.mrf.mxu0
        %v1585 = vadd.f32 %v1079, %v1584
        %v1586 = vpop.f32.mrf.mxu0
        %v1587 = vadd.f32 %v1083, %v1586
        %1588 = vmatprep.mubr.bf16.mxu0 %v1213
        %1589 = vmatmul.mubr.bf16.gmra.mxu0 %v1212
        %v1590 = vpop.f32.mrf.mxu0
        %v1591 = vadd.f32 %v1079, %v1590
        %v1592 = vpop.f32.mrf.mxu0
        %v1593 = vadd.f32 %v1083, %v1592
        %v1594 = vpop.f32.mrf.mxu0
        %v1595 = vadd.f32 %v1079, %v1594
        %v1596 = vpop.f32.mrf.mxu0
        %v1597 = vadd.f32 %v1083, %v1596
        %1598 = vdwg.mxu0
        %v1599 = vpack.c.bf16 %v1445, %v1441
        %v1600 = vpack.c.bf16 %v1447, %v1443
        %v1601 = vpack.c.bf16 %v1455, %v1451
        %v1602 = vpack.c.bf16 %v1457, %v1453
        %v1603 = vpack.c.bf16 %v1465, %v1461
        %v1604 = vpack.c.bf16 %v1467, %v1463
        %v1605 = vpack.c.bf16 %v1475, %v1471
        %v1606 = vpack.c.bf16 %v1477, %v1473
        %v1607 = vpack.c.bf16 %v1485, %v1481
        %v1608 = vpack.c.bf16 %v1487, %v1483
        %v1609 = vpack.c.bf16 %v1495, %v1491
        %v1610 = vpack.c.bf16 %v1497, %v1493
        %v1611 = vpack.c.bf16 %v1505, %v1501
        %v1612 = vpack.c.bf16 %v1507, %v1503
        %v1613 = vpack.c.bf16 %v1515, %v1511
        %v1614 = vpack.c.bf16 %v1517, %v1513
        %v1615 = vpack.c.bf16 %v1525, %v1521
        %v1616 = vpack.c.bf16 %v1527, %v1523
        %v1617 = vpack.c.bf16 %v1535, %v1531
        %v1618 = vpack.c.bf16 %v1537, %v1533
        %v1619 = vpack.c.bf16 %v1545, %v1541
        %v1620 = vpack.c.bf16 %v1547, %v1543
        %v1621 = vpack.c.bf16 %v1555, %v1551
        %v1622 = vpack.c.bf16 %v1557, %v1553
        %v1623 = vpack.c.bf16 %v1565, %v1561
        %v1624 = vpack.c.bf16 %v1567, %v1563
        %v1625 = vpack.c.bf16 %v1575, %v1571
        %v1626 = vpack.c.bf16 %v1577, %v1573
        %v1627 = vpack.c.bf16 %v1585, %v1581
        %v1628 = vpack.c.bf16 %v1587, %v1583
        %v1629 = vpack.c.bf16 %v1595, %v1591
        %v1630 = vpack.c.bf16 %v1597, %v1593
        %v1663 = vunpack.c.l.b16 %v1599
        %v1664 = vunpack.c.l.b16 %v1600
        %v1665 = vunpack.c.h.b16 %v1599
        %v1666 = vunpack.c.h.b16 %v1600
        %v1667 = vunpack.c.l.b16 %v1601
        %v1668 = vunpack.c.l.b16 %v1602
        %v1669 = vunpack.c.h.b16 %v1601
        %v1670 = vunpack.c.h.b16 %v1602
        %v1671 = vunpack.c.l.b16 %v1603
        %v1672 = vunpack.c.l.b16 %v1604
        %v1673 = vunpack.c.h.b16 %v1603
        %v1674 = vunpack.c.h.b16 %v1604
        %v1675 = vunpack.c.l.b16 %v1605
        %v1676 = vunpack.c.l.b16 %v1606
        %v1677 = vunpack.c.h.b16 %v1605
        %v1678 = vunpack.c.h.b16 %v1606
        %v1679 = vunpack.c.l.b16 %v1607
        %v1680 = vunpack.c.l.b16 %v1608
        %v1681 = vunpack.c.h.b16 %v1607
        %v1682 = vunpack.c.h.b16 %v1608
        %v1683 = vunpack.c.l.b16 %v1609
        %v1684 = vunpack.c.l.b16 %v1610
        %v1685 = vunpack.c.h.b16 %v1609
        %v1686 = vunpack.c.h.b16 %v1610
        %v1687 = vunpack.c.l.b16 %v1611
        %v1688 = vunpack.c.l.b16 %v1612
        %v1689 = vunpack.c.h.b16 %v1611
        %v1690 = vunpack.c.h.b16 %v1612
        %v1691 = vunpack.c.l.b16 %v1613
        %v1692 = vunpack.c.l.b16 %v1614
        %v1693 = vunpack.c.h.b16 %v1613
        %v1694 = vunpack.c.h.b16 %v1614
        %v1695 = vunpack.c.l.b16 %v1615
        %v1696 = vunpack.c.l.b16 %v1616
        %v1697 = vunpack.c.h.b16 %v1615
        %v1698 = vunpack.c.h.b16 %v1616
        %v1699 = vunpack.c.l.b16 %v1617
        %v1700 = vunpack.c.l.b16 %v1618
        %v1701 = vunpack.c.h.b16 %v1617
        %v1702 = vunpack.c.h.b16 %v1618
        %v1703 = vunpack.c.l.b16 %v1619
        %v1704 = vunpack.c.l.b16 %v1620
        %v1705 = vunpack.c.h.b16 %v1619
        %v1706 = vunpack.c.h.b16 %v1620
        %v1707 = vunpack.c.l.b16 %v1621
        %v1708 = vunpack.c.l.b16 %v1622
        %v1709 = vunpack.c.h.b16 %v1621
        %v1710 = vunpack.c.h.b16 %v1622
        %v1711 = vunpack.c.l.b16 %v1623
        %v1712 = vunpack.c.l.b16 %v1624
        %v1713 = vunpack.c.h.b16 %v1623
        %v1714 = vunpack.c.h.b16 %v1624
        %v1715 = vunpack.c.l.b16 %v1625
        %v1716 = vunpack.c.l.b16 %v1626
        %v1717 = vunpack.c.h.b16 %v1625
        %v1718 = vunpack.c.h.b16 %v1626
        %v1719 = vunpack.c.l.b16 %v1627
        %v1720 = vunpack.c.l.b16 %v1628
        %v1721 = vunpack.c.h.b16 %v1627
        %v1722 = vunpack.c.h.b16 %v1628
        %v1723 = vunpack.c.l.b16 %v1629
        %v1724 = vunpack.c.l.b16 %v1630
        %v1725 = vunpack.c.h.b16 %v1629
        %v1726 = vunpack.c.h.b16 %v1630
        %v1727 = vpack.c.b16 %v1664, %v1663
        %v1728 = vpack.c.b16 %v1666, %v1665
        %v1729 = vpack.c.b16 %v1668, %v1667
        %v1730 = vpack.c.b16 %v1670, %v1669
        %v1731 = vpack.c.b16 %v1672, %v1671
        %v1732 = vpack.c.b16 %v1674, %v1673
        %v1733 = vpack.c.b16 %v1676, %v1675
        %v1734 = vpack.c.b16 %v1678, %v1677
        %v1735 = vpack.c.b16 %v1680, %v1679
        %v1736 = vpack.c.b16 %v1682, %v1681
        %v1737 = vpack.c.b16 %v1684, %v1683
        %v1738 = vpack.c.b16 %v1686, %v1685
        %v1739 = vpack.c.b16 %v1688, %v1687
        %v1740 = vpack.c.b16 %v1690, %v1689
        %v1741 = vpack.c.b16 %v1692, %v1691
        %v1742 = vpack.c.b16 %v1694, %v1693
        %v1743 = vpack.c.b16 %v1696, %v1695
        %v1744 = vpack.c.b16 %v1698, %v1697
        %v1745 = vpack.c.b16 %v1700, %v1699
        %v1746 = vpack.c.b16 %v1702, %v1701
        %v1747 = vpack.c.b16 %v1704, %v1703
        %v1748 = vpack.c.b16 %v1706, %v1705
        %v1749 = vpack.c.b16 %v1708, %v1707
        %v1750 = vpack.c.b16 %v1710, %v1709
        %v1751 = vpack.c.b16 %v1712, %v1711
        %v1752 = vpack.c.b16 %v1714, %v1713
        %v1753 = vpack.c.b16 %v1716, %v1715
        %v1754 = vpack.c.b16 %v1718, %v1717
        %v1755 = vpack.c.b16 %v1720, %v1719
        %v1756 = vpack.c.b16 %v1722, %v1721
        %v1757 = vpack.c.b16 %v1724, %v1723
        %v1758 = vpack.c.b16 %v1726, %v1725
        %1791 = vst [vmem:[%s315] sm:$0xff] %v1727
        %1792 = vst [vmem:[%s315 + $0x8] sm:$0xff] %v1728
        %1793 = vst [vmem:[%s315 + $0x10] sm:$0xff] %v1729
        %1794 = vst [vmem:[%s315 + $0x18] sm:$0xff] %v1730
        %1795 = vst [vmem:[%s315 + $0x20] sm:$0xff] %v1731
        %1796 = vst [vmem:[%s315 + $0x28] sm:$0xff] %v1732
        %1797 = vst [vmem:[%s315 + $0x30] sm:$0xff] %v1733
        %1798 = vst [vmem:[%s315 + $0x38] sm:$0xff] %v1734
        %1799 = vst [vmem:[%s315 + $0x40] sm:$0xff] %v1735
        %1800 = vst [vmem:[%s315 + $0x48] sm:$0xff] %v1736
        %1801 = vst [vmem:[%s315 + $0x50] sm:$0xff] %v1737
        %1802 = vst [vmem:[%s315 + $0x58] sm:$0xff] %v1738
        %1803 = vst [vmem:[%s315 + $0x60] sm:$0xff] %v1739
        %1804 = vst [vmem:[%s315 + $0x68] sm:$0xff] %v1740
        %1805 = vst [vmem:[%s315 + $0x70] sm:$0xff] %v1741
        %1806 = vst [vmem:[%s315 + $0x78] sm:$0xff] %v1742
        %1807 = vst [vmem:[%s315 + $0x80] sm:$0xff] %v1743
        %1808 = vst [vmem:[%s315 + $0x88] sm:$0xff] %v1744
        %1809 = vst [vmem:[%s315 + $0x90] sm:$0xff] %v1745
        %1810 = vst [vmem:[%s315 + $0x98] sm:$0xff] %v1746
        %1811 = vst [vmem:[%s315 + $0xa0] sm:$0xff] %v1747
        %1812 = vst [vmem:[%s315 + $0xa8] sm:$0xff] %v1748
        %1813 = vst [vmem:[%s315 + $0xb0] sm:$0xff] %v1749
        %1814 = vst [vmem:[%s315 + $0xb8] sm:$0xff] %v1750
        %1815 = vst [vmem:[%s315 + $0xc0] sm:$0xff] %v1751
        %1816 = vst [vmem:[%s315 + $0xc8] sm:$0xff] %v1752
        %1817 = vst [vmem:[%s315 + $0xd0] sm:$0xff] %v1753
        %1818 = vst [vmem:[%s315 + $0xd8] sm:$0xff] %v1754
        %1819 = vst [vmem:[%s315 + $0xe0] sm:$0xff] %v1755
        %1820 = vst [vmem:[%s315 + $0xe8] sm:$0xff] %v1756
        %1821 = vst [vmem:[%s315 + $0xf0] sm:$0xff] %v1757
        %1822 = vst [vmem:[%s315 + $0xf8] sm:$0xff] %v1758
        %s1823 = sand.u32 %s143, 1
        %s1824 = scalar_lea.sflag [#allocation5], %s1823
        %s1825 = sand.u32 %s143, 1
        %s1826 = smul.addr %s1825, 256
        %s1827 = scalar_lea.vmem [#allocation10], %s1826
        // Predicated region
        $region57: #{tpu_custom_call.1} parent=35 // pred_check
          %p1828 = pneg %p153
        $region58: #{tpu_custom_call.1} parent=35 // pred_check_branch
          %1830 = sbr.rel (%p1828) target = $region60
        $region59: #{tpu_custom_call.1} parent=35 // pred_region
          %s1831 = smul.u32 32, %s26
          %s1832 = smul.u32 2, %s27
          %s1834 = ssub.s32 4096, 4096
          %1835 = vsyncadd %s1824, %s1834
          %s1836 = smul.addr %s1831, 6
          %s1837 = sadd.s32 %s1832, %s1836
          %s1838 = smul.addr %s1837, 64
          %s1839 = scalar_lea.hbm %s4, %s1838
          %s1840 = sshll.u32 %s1827, 4
          %s1841 = int_to_ptr.vmem [resolvable:$true] %s1840
          %1846 = dma.vmem_to_hbm [thread:$0]  %s1841, 4096, %s1839, %s1824, 128, 384, 8
        $region60: #{tpu_custom_call.1} parent=35 // pred_fallthru
          _
      $region36: #{tpu_custom_call.1} parent=5 // pred_fallthru
        _
      %p1847 = scmp.le.s32.totalorder 2, %s17
      // Predicated region
      $region61: #{tpu_custom_call.1} parent=5 // pred_check
        %p1848 = pneg %p1847
      $region62: #{tpu_custom_call.1} parent=5 // pred_check_branch
        %1850 = sbr.rel (%p1848) target = $region64
      $region63: #{tpu_custom_call.1} parent=5 // pred_region
        %s1851 = ssub.s32 %s17, 2
        // Predicated region
        $region65: #{tpu_custom_call.1} parent=63 // pred_check
          %p1852 = pneg %p159
        $region66: #{tpu_custom_call.1} parent=63 // pred_check_branch
          %1854 = sbr.rel (%p1852) target = $region68
        $region67: #{tpu_custom_call.1} parent=63 // pred_region
          %s1855 = sand.u32 %s144, 1
          %s1856 = scalar_lea.sflag [#allocation5], %s1855
          %s1857 = sand.u32 %s144, 1
          %s1858 = smul.addr %s1857, 256
          %s1859 = scalar_lea.vmem [#allocation10], %s1858
          %1860 = dma.done %s1856, 4096
        $region68: #{tpu_custom_call.1} parent=63 // pred_fallthru
          _
      $region64: #{tpu_custom_call.1} parent=5 // pred_fallthru
        _
    $region6: #{tpu_custom_call.1} parent=1 // loop_footer
      %s21 = sadd.s32 1, %s17
    $region7: #{tpu_custom_call.1} parent=1 // loop_footer_branch
      %16 = sbr.rel target = $region3
    $region8: #{tpu_custom_call.1} parent=1 // loop_exit
      _
    %1861 = vsyncpa [#allocation4], 1
    %s1862 = scalar_lea.sflag [#allocation4], 1
    %1863 = vsyncpa %s1862, 1
    %1864 = vsyncpa [#allocation7], 1
    %1865 = vsyncpa [#allocation5], 1
    %s1866 = scalar_lea.sflag [#allocation5], 1
    %1867 = vsyncpa %s1866, 1

</llo_original>
